<compile_context>
chip_gen: v7x
topology: tpu7x:2x2x1
jax: 0.10.0
libtpu: 0.0.40
codegen_flags: <defaults>
</compile_context>

<pallas_src>
import functools

import jax
import jax.numpy as jnp
import numpy as np
from jax.experimental import pallas as pl
from jax.experimental.pallas import tpu as pltpu


def autopad(k, p=None, d=1):
    """Pad to 'same' shape outputs (mirrors the PyTorch helper)."""
    if d > 1:
        k = d * (k - 1) + 1 if isinstance(k, int) else [d * (x - 1) + 1 for x in k]
    if p is None:
        p = k // 2 if isinstance(k, int) else [x // 2 for x in k]
    return p


# ------------------------------- helpers ------------------------------------


def _round_up(x, m):
    return (x + m - 1) // m * m


def _vmem_capacity_bytes():
    try:
        info = pltpu.get_tpu_info()
        cap = int(getattr(info, "vmem_capacity_bytes", 64 * 1024 * 1024))
        return min(cap, 128 * 1024 * 1024)
    except Exception:
        return 64 * 1024 * 1024  # conservative (v7x per-TensorCore VMEM)


def _tiled_bytes(rows, cols, itemsize):
    """VMEM footprint of a (rows, cols) trailing-dims block under native (sublane,128) tiling."""
    sub = max(8, 32 // itemsize)          # 8 sublanes for f32, 16 for bf16
    return _round_up(max(rows, 1), sub) * _round_up(max(cols, 1), 128) * itemsize


def _pick_tc2(C2p):
    """MXU-N tile: 256 on v6e/v7x (2x256x256 MXU) when possible, 128 on v5e."""
    tc2 = 256 if (C2p % 256 == 0) else 128
    try:
        kind = jax.devices()[0].device_kind.lower()
        if "v5 lite" in kind or "v5e" in kind or "v5litepod" in kind:
            tc2 = 128
    except Exception:
        pass
    return tc2


# ----------------------------- Pallas kernel --------------------------------


def _make_kernel(TH, Wo, C1, K, TC2, k, s, d):
    """Kernel for one (row-tile, C2-tile) grid step.

    x_ref     : (L, Wp, C1)    overlapping input row tile (L = (TH-1)*s + (k-1)*d + 1)
    w_ref     : (K, TC2)       flattened conv weight, K = k*k*C1, im2col K-order (kh,kw,c)
    scale_ref : (1, TC2) f32   folded BN scale = gamma / sqrt(var + eps)
    shift_ref : (1, TC2) f32   folded BN shift = beta - mean * scale
    o_ref     : (TH*Wo, TC2)   output slab tile
    """
    h_span = (TH - 1) * s + 1
    w_span = (Wo - 1) * s + 1

    def kernel(x_ref, w_ref, scale_ref, shift_ref, o_ref):
        xin = x_ref[...]                                          # (L, Wp, C1)
        # In-VMEM im2col: k*k shifted windows packed along the lane (K) axis, then ONE
        # MXU matmul with K = k*k*C1.  Accumulation stays inside the MXU -> no f32
        # accumulator read-modify-write chain, no per-(kh,kw) small-K matmuls.
        parts = []
        for kh in range(k):
            for kw in range(k):
                if s == 1:
                    parts.append(xin[kh * d:kh * d + TH, kw * d:kw * d + Wo, :])
                else:
                    # TODO(synk): stride>1 would be cheaper with an s*s dense-phase
                    # pre-split in the wrapper instead of strided VMEM slices.
                    parts.append(xin[kh * d:kh * d + h_span:s,
                                     kw * d:kw * d + w_span:s, :])
        slab = parts[0] if len(parts) == 1 else jnp.concatenate(parts, axis=-1)
        slab = slab.reshape(TH * Wo, K)                           # (M, K) im2col LHS
        acc = jnp.dot(slab, w_ref[...], preferred_element_type=jnp.float32)
        y = acc * scale_ref[...] + shift_ref[...]                 # folded BatchNorm (affine)
        y = y * jax.nn.sigmoid(y)                                 # SiLU
        o_ref[...] = y.astype(o_ref.dtype)

    return kernel


# ------------------------------ Conv wrapper ---------------------------------


def conv_bn_silu(x, weight, bn_gamma, bn_beta, bn_mean, bn_var, *,
                 stride=1, padding=None, dilation=1, groups=1, eps=1e-5,
                 compute_dtype=jnp.bfloat16, out_dtype=jnp.float32,
                 channels_last_out=False):
    """Ultralytics Conv.forward: SiLU(BN(Conv2d(x))).  x is NCHW, output NCHW."""
    N, C1, H, W = x.shape
    C2, C1w, kH, kW = weight.shape
    assert groups == 1 and C1w == C1, "grouped conv not supported"  # TODO(synk): g > 1
    assert kH == kW, "only square kernels supported"
    # TODO(synk): only the default SiLU activation path (act=True) is implemented.
    k, s, d = int(kH), int(stride), int(dilation)
    p = autopad(k, padding, d)

    Ho = (H + 2 * p - d * (k - 1) - 1) // s + 1
    Wo = (W + 2 * p - d * (k - 1) - 1) // s + 1
    Wp = W + 2 * p
    K = k * k * C1

    ib = jnp.dtype(compute_dtype).itemsize
    ob = jnp.dtype(out_dtype).itemsize

    # ---- channel tiling (lane-dense output / MXU-N occupancy) ----------------
    C2p = _round_up(C2, 128)
    TC2 = _pick_tc2(C2p)
    num_c2 = C2p // TC2

    # ---- row tiling: largest TH whose working set fits the VMEM budget -------
    cap = _vmem_capacity_bytes()                       # per-TensorCore VMEM
    vmem_limit = min(int(cap * 0.85), 100 * 1024 * 1024)
    budget = int(vmem_limit * 0.85)

    def _vmem_est(th):
        L_ = (th - 1) * s + (k - 1) * d + 1
        in_tile = L_ * _tiled_bytes(Wp, C1, ib)                  # tiling-aware footprint
        w_tile = _tiled_bytes(K, TC2, ib)
        slab = _tiled_bytes(th * Wo, K, ib)
        out_tile = _tiled_bytes(th * Wo, TC2, ob)
        acc = _tiled_bytes(th * Wo, TC2, 4)
        vecs = 2 * _tiled_bytes(1, TC2, 4)
        return (2 * in_tile + 2 * w_tile + 2 * out_tile + 2 * vecs   # double-buffered I/O
                + in_tile + 2 * slab + acc)                          # in-kernel temporaries

    th_cap = min(_round_up(Ho, 8), 512)
    if N == 1 and num_c2 == 1 and Ho > 8:
        # Keep >= 2 row tiles so both v7x TensorCores get work for small-batch inference.
        th_cap = min(th_cap, max(8, _round_up((Ho + 1) // 2, 8)))
    TH = 8
    for th in range(8, th_cap + 1, 8):
        if _vmem_est(th) <= budget:
            TH = th

    num_ho = (Ho + TH - 1) // TH
    Ho_pad = num_ho * TH
    TIN = TH * s
    L = (TH - 1) * s + (k - 1) * d + 1
    T = N * num_ho

    # ---- layout glue (cheap XLA passes, no k*k HBM im2col) ------------------
    Hp = max(H + 2 * p, (num_ho - 1) * TIN + L)
    xt = jnp.transpose(x, (0, 2, 3, 1)).astype(compute_dtype)           # NCHW -> NHWC
    xpad = jnp.pad(xt, ((0, 0), (p, Hp - H - p), (p, p), (0, 0)))        # (N, Hp, Wp, C1)
    # Overlapping row tiles ((k-1)*d halo rows duplicated per tile) so the kernel needs
    # no halo BlockSpec, no concatenate and no scratch copy of the main tile.
    row_idx = jnp.arange(num_ho)[:, None] * TIN + jnp.arange(L)[None, :]
    xtiles = xpad[:, row_idx].reshape(T, L, Wp, C1)                      # (T, L, Wp, C1)

    # Weight flattened to the im2col K-order (kh, kw, c) and padded on C2.
    w2 = jnp.transpose(weight, (2, 3, 1, 0)).reshape(K, C2)
    w2 = jnp.pad(w2, ((0, 0), (0, C2p - C2))).astype(compute_dtype)

    scale = (bn_gamma / jnp.sqrt(bn_var + eps)).astype(jnp.float32)
    shift = (bn_beta - bn_mean * scale).astype(jnp.float32)
    scale = jnp.pad(scale, (0, C2p - C2)).reshape(1, C2p)
    shift = jnp.pad(shift, (0, C2p - C2)).reshape(1, C2p)

    # ---- grid ordering: keep whichever stream has more redundant traffic resident ----
    act_bytes = T * L * Wp * C1 * ib
    w_bytes = K * C2p * ib
    c2_outer = (num_c2 - 1) * act_bytes <= (T - 1) * w_bytes
    if c2_outer:                                # weight slab stays resident across row tiles
        grid = (num_c2, T)
        t_ix = lambda a, b: b
        c_ix = lambda a, b: a
    else:                                       # activations single-pass, weights re-read
        grid = (T, num_c2)
        t_ix = lambda a, b: a
        c_ix = lambda a, b: b

    M_pad = T * TH * Wo
    kernel = _make_kernel(TH, Wo, C1, K, TC2, k, s, d)

    cost = pl.CostEstimate(
        flops=int(2 * M_pad * K * C2p),
        transcendentals=int(M_pad * C2p),
        bytes_accessed=int(xtiles.size * ib + w2.size * ib + M_pad * C2p * ob
                           + 2 * C2p * 4))

    out2d = pl.pallas_call(
        kernel,
        out_shape=jax.ShapeDtypeStruct((M_pad, C2p), out_dtype),
        grid_spec=pltpu.PrefetchScalarGridSpec(
            num_scalar_prefetch=0,
            grid=grid,
            in_specs=[
                # single overlapping input row tile of the padded NHWC input
                pl.BlockSpec((None, L, Wp, C1),
                             lambda a, b: (t_ix(a, b), 0, 0, 0)),
                # flattened im2col weight slab for this C2 tile
                pl.BlockSpec((K, TC2), lambda a, b: (0, c_ix(a, b))),
                pl.BlockSpec((1, TC2), lambda a, b: (0, c_ix(a, b))),
                pl.BlockSpec((1, TC2), lambda a, b: (0, c_ix(a, b))),
            ],
            out_specs=pl.BlockSpec((TH * Wo, TC2),
                                   lambda a, b: (t_ix(a, b), c_ix(a, b))),
        ),
        compiler_params=pltpu.CompilerParams(
            dimension_semantics=("parallel", "parallel"),
            vmem_limit_bytes=vmem_limit),
        cost_estimate=cost,
    )(xtiles, w2, scale, shift)

    out = out2d.reshape(N, Ho_pad, Wo, C2p)[:, :Ho, :, :C2]
    if channels_last_out:
        return out                                      # NHWC, no extra transpose pass
    return jnp.transpose(out, (0, 3, 1, 2))             # NCHW (PyTorch semantics)


# ---------------------------------- main -------------------------------------


if __name__ == "__main__":
    # Conv(c1=4, c2=8, k=3, s=1) -> padding = autopad(3) = 1, groups=1, dilation=1
    N, C1, H, W = 2, 4, 16, 16
    C2, k, s = 8, 3, 1

    key = jax.random.PRNGKey(0)
    kx, kw_ = jax.random.split(key)
    x = jax.random.normal(kx, (N, C1, H, W), dtype=jnp.float32)
    weight = jax.random.normal(kw_, (C2, C1, k, k), dtype=jnp.float32) * 0.1

    # Deterministic BatchNorm2d parameters / running stats (inference semantics).
    bn_gamma = jnp.linspace(0.5, 1.5, C2, dtype=jnp.float32)
    bn_beta = jnp.linspace(-0.2, 0.2, C2, dtype=jnp.float32)
    bn_mean = jnp.linspace(-0.1, 0.1, C2, dtype=jnp.float32)
    bn_var = jnp.linspace(0.8, 1.2, C2, dtype=jnp.float32)

    # Pure-JAX float32 reference.
    p = autopad(k)
    ref = jax.lax.conv_general_dilated(
        x, weight, window_strides=(s, s), padding=[(p, p), (p, p)],
        dimension_numbers=("NCHW", "OIHW", "NCHW"))
    r_scale = (bn_gamma / jnp.sqrt(bn_var + 1e-5)).reshape(1, C2, 1, 1)
    r_shift = (bn_beta - bn_mean * (bn_gamma / jnp.sqrt(bn_var + 1e-5))).reshape(1, C2, 1, 1)
    ref = ref * r_scale + r_shift
    ref = np.asarray(ref * jax.nn.sigmoid(ref))

    # 1) default perf config: bf16 inputs/weights, f32 accumulation.
    fwd_bf16 = jax.jit(functools.partial(conv_bn_silu, stride=s))
    y = jax.block_until_ready(fwd_bf16(x, weight, bn_gamma, bn_beta, bn_mean, bn_var))
    assert y.shape == (N, C2, H, W), y.shape
    np.testing.assert_allclose(np.asarray(y), ref, rtol=2e-2, atol=2e-2)

    # 2) float32 compute path: tight check of the kernel math.
    fwd_f32 = jax.jit(functools.partial(conv_bn_silu, stride=s,
                                        compute_dtype=jnp.float32))
    y32 = jax.block_until_ready(fwd_f32(x, weight, bn_gamma, bn_beta, bn_mean, bn_var))
    np.testing.assert_allclose(np.asarray(y32), ref, rtol=1e-3, atol=1e-3)

    print("KERNEL_OK")
</pallas_src>

<mosaic_0001>
module attributes {stable_mosaic.version = 11 : i64} {
  func.func @kernel(%arg0: i32, %arg1: i32, %arg2: memref<1x18x18x4xbf16, #tpu.memory_space<vmem>>, %arg3: memref<36x128xbf16, #tpu.memory_space<vmem>>, %arg4: memref<1x128xf32, #tpu.memory_space<vmem>>, %arg5: memref<1x128xf32, #tpu.memory_space<vmem>>, %arg6: memref<256x128xf32, #tpu.memory_space<vmem>>) attributes {dimension_semantics = [#tpu.dimension_semantics<parallel>, #tpu.dimension_semantics<parallel>], iteration_bounds = array<i64: 1, 2>, scalar_prefetch = 0 : i64, scratch_operands = 0 : i64, tpu.core_type = #tpu.core_type<tc>, window_params = [{transform_indices = @transform_0, window_bounds = array<i64: 1, 18, 18, 4>}, {transform_indices = @transform_1, window_bounds = array<i64: 36, 128>}, {transform_indices = @transform_2, window_bounds = array<i64: 1, 128>}, {transform_indices = @transform_3, window_bounds = array<i64: 1, 128>}, {transform_indices = @transform_4, window_bounds = array<i64: 256, 128>}]} {
    %c0 = arith.constant 0 : index
    %c0_0 = arith.constant 0 : index
    %c0_1 = arith.constant 0 : index
    %c0_2 = arith.constant 0 : index
    %0 = vector.load %arg2[%c0, %c0_0, %c0_1, %c0_2] : memref<1x18x18x4xbf16, #tpu.memory_space<vmem>>, vector<1x18x18x4xbf16>
    %1 = vector.shape_cast %0 : vector<1x18x18x4xbf16> to vector<18x18x4xbf16>
    %2 = vector.extract_strided_slice %1 {offsets = [0, 0, 0], sizes = [16, 16, 4], strides = [1, 1, 1]} : vector<18x18x4xbf16> to vector<16x16x4xbf16>
    %3 = vector.extract_strided_slice %1 {offsets = [0, 1, 0], sizes = [16, 16, 4], strides = [1, 1, 1]} : vector<18x18x4xbf16> to vector<16x16x4xbf16>
    %4 = vector.extract_strided_slice %1 {offsets = [0, 2, 0], sizes = [16, 16, 4], strides = [1, 1, 1]} : vector<18x18x4xbf16> to vector<16x16x4xbf16>
    %5 = vector.extract_strided_slice %1 {offsets = [1, 0, 0], sizes = [16, 16, 4], strides = [1, 1, 1]} : vector<18x18x4xbf16> to vector<16x16x4xbf16>
    %6 = vector.extract_strided_slice %1 {offsets = [1, 1, 0], sizes = [16, 16, 4], strides = [1, 1, 1]} : vector<18x18x4xbf16> to vector<16x16x4xbf16>
    %7 = vector.extract_strided_slice %1 {offsets = [1, 2, 0], sizes = [16, 16, 4], strides = [1, 1, 1]} : vector<18x18x4xbf16> to vector<16x16x4xbf16>
    %8 = vector.extract_strided_slice %1 {offsets = [2, 0, 0], sizes = [16, 16, 4], strides = [1, 1, 1]} : vector<18x18x4xbf16> to vector<16x16x4xbf16>
    %9 = vector.extract_strided_slice %1 {offsets = [2, 1, 0], sizes = [16, 16, 4], strides = [1, 1, 1]} : vector<18x18x4xbf16> to vector<16x16x4xbf16>
    %10 = vector.extract_strided_slice %1 {offsets = [2, 2, 0], sizes = [16, 16, 4], strides = [1, 1, 1]} : vector<18x18x4xbf16> to vector<16x16x4xbf16>
    %11 = tpu.concatenate %2, %3, %4, %5, %6, %7, %8, %9, %10 in 2 : vector<16x16x4xbf16>, vector<16x16x4xbf16>, vector<16x16x4xbf16>, vector<16x16x4xbf16>, vector<16x16x4xbf16>, vector<16x16x4xbf16>, vector<16x16x4xbf16>, vector<16x16x4xbf16>, vector<16x16x4xbf16> -> vector<16x16x36xbf16>
    %12 = vector.shape_cast %11 : vector<16x16x36xbf16> to vector<256x36xbf16>
    %c0_3 = arith.constant 0 : index
    %c0_4 = arith.constant 0 : index
    %13 = vector.load %arg3[%c0_3, %c0_4] : memref<36x128xbf16, #tpu.memory_space<vmem>>, vector<36x128xbf16>
    %cst = arith.constant dense<0.000000e+00> : vector<256x128xf32>
    %14 = tpu.matmul %12, %13, %cst {dimension_numbers = #tpu.dot_dimension_numbers<[1], [0], [0], [1], [0, 0, 1, 1], [], []>} : vector<256x36xbf16>, vector<36x128xbf16>, vector<256x128xf32> -> vector<256x128xf32>
    %c0_5 = arith.constant 0 : index
    %c0_6 = arith.constant 0 : index
    %15 = vector.load %arg4[%c0_5, %c0_6] : memref<1x128xf32, #tpu.memory_space<vmem>>, vector<1x128xf32>
    %16 = vector.broadcast %15 : vector<1x128xf32> to vector<256x128xf32>
    %17 = arith.mulf %14, %16 : vector<256x128xf32>
    %c0_7 = arith.constant 0 : index
    %c0_8 = arith.constant 0 : index
    %18 = vector.load %arg5[%c0_7, %c0_8] : memref<1x128xf32, #tpu.memory_space<vmem>>, vector<1x128xf32>
    %19 = vector.broadcast %18 : vector<1x128xf32> to vector<256x128xf32>
    %20 = arith.addf %17, %19 : vector<256x128xf32>
    %21 = arith.negf %20 : vector<256x128xf32>
    %22 = math.exp %21 : vector<256x128xf32>
    %cst_9 = arith.constant 1.000000e+00 : f32
    %23 = vector.broadcast %cst_9 : f32 to vector<256x128xf32>
    %24 = arith.addf %23, %22 : vector<256x128xf32>
    %25 = arith.divf %23, %24 : vector<256x128xf32>
    %26 = arith.mulf %20, %25 : vector<256x128xf32>
    %c0_10 = arith.constant 0 : index
    %c0_11 = arith.constant 0 : index
    %27 = vector.load %arg6[%c0_10, %c0_11] : memref<256x128xf32, #tpu.memory_space<vmem>>, vector<256x128xf32>
    tpu.vector_store %arg6[%c0_10, %c0_11], %26 {strides = array<i32>} : memref<256x128xf32, #tpu.memory_space<vmem>>, vector<256x128xf32>,
    return
  }
  func.func @transform_0(%arg0: i32, %arg1: i32) -> (i32, i32, i32, i32) {
    %c0_i32 = arith.constant 0 : i32
    %c0_i32_0 = arith.constant 0 : i32
    %c0_i32_1 = arith.constant 0 : i32
    %c0_i32_2 = arith.constant 0 : i32
    return %arg1, %c0_i32, %c0_i32_0, %c0_i32_1 : i32, i32, i32, i32
  }
  func.func @transform_1(%arg0: i32, %arg1: i32) -> (i32, i32) {
    %c0_i32 = arith.constant 0 : i32
    %c0_i32_0 = arith.constant 0 : i32
    return %c0_i32, %arg0 : i32, i32
  }
  func.func @transform_2(%arg0: i32, %arg1: i32) -> (i32, i32) {
    %c0_i32 = arith.constant 0 : i32
    %c0_i32_0 = arith.constant 0 : i32
    return %c0_i32, %arg0 : i32, i32
  }
  func.func @transform_3(%arg0: i32, %arg1: i32) -> (i32, i32) {
    %c0_i32 = arith.constant 0 : i32
    %c0_i32_0 = arith.constant 0 : i32
    return %c0_i32, %arg0 : i32, i32
  }
  func.func @transform_4(%arg0: i32, %arg1: i32) -> (i32, i32) {
    %c0_i32 = arith.constant 0 : i32
    return %arg1, %arg0 : i32, i32
  }
}

</mosaic_0001>

<llo_original>
// kernel: conv_bn_silu.1
$region0: #{conv_bn_silu.1}
  #allocation0 [shape = 'u32[]', space=smem, size = 0x4, offset = 0x4, fixed_abs, tag = 'smem constant byte address 0x4 - core index']
  #allocation1 [shape = 'u32[144,128]{1,0:T(1,128)}', space=vmem, size = 0x12000, scoped, tag = 'internal scratch']
  %s0 = inlined_call_operand.vmem [shape: bf16[2,18,18,4], index: 0, kind: input, shape index: {}]
  %s1 = inlined_call_operand.vmem [shape: bf16[36,128], index: 1, kind: input, shape index: {}]
  %s2 = inlined_call_operand.vmem [shape: f32[1,128], index: 2, kind: input, shape index: {}]
  %s3 = inlined_call_operand.vmem [shape: f32[1,128], index: 3, kind: input, shape index: {}]
  %s4 = inlined_call_operand.vmem [shape: f32[512,128], index: 4, kind: output, shape index: {}]
  %s5 = sld [smem:[#allocation0]]
  $region49: #{conv_bn_silu.1} parent=0
    _
  %s7 = ssub.s32 1, %s5
  %s8 = scalar_select 0, %s7, %s5
  loop: start=0, step=1, limit=4
  $region2: #{conv_bn_silu.1} parent=0 // loop_pre_header
    _
  $region3: #{conv_bn_silu.1} parent=0 // loop_header
    %s10 = sphi 0, %s14
    %p11 = scmp.ge.s32.totalorder %s10, 4
    %s17 = sphi 0, %s29
    %s18 = sphi 0, %s25
    %s19 = sphi 0, %s17
    %s20 = sphi 0, %s18
    %s21 = sphi 0, %s19
    %s22 = sphi 0, %s20
    %s32 = sphi 0, %s34
    %s35 = sphi 0, %s32
    %s36 = sphi 0, %s35
    %s52 = sphi 0, %s36
    %s58 = sphi 0, %s60
    %s61 = sphi 0, %s58
    %s62 = sphi 0, %s61
    %s78 = sphi 0, %s62
    %s84 = sphi 0, %s86
    %s87 = sphi 0, %s84
    %s88 = sphi 0, %s87
    %s104 = sphi 0, %s88
    %s110 = sphi 0, %s112
    %s113 = sphi 0, %s110
    %s114 = sphi 0, %s113
    %s130 = sphi 0, %s114
    %s138 = sphi 0, %s140
    %s141 = sphi 0, %s138
    %s142 = sphi 0, %s141
    %s158 = sphi 0, %s142
  $region4: #{conv_bn_silu.1} parent=0 // loop_header_branch
    %13 = sbr.rel (%p11) target = $region8
  $region5: #{conv_bn_silu.1} parent=0 // loop_body
    %s15 = ssub.s32 %s10, 1
    %s16 = ssub.s32 %s10, 2
    %s23 = sadd.s32 1, %s18
    %p24 = scmp.ge.s32.totalorder %s23, 2
    %s25 = scalar_select %p24, 0, %s23
    %s26 = sadd.s32 1, %s17
    %s27 = scalar_select %p24, %s26, %s17
    %p28 = scmp.ge.s32.totalorder %s27, 1
    %s29 = scalar_select %p28, 0, %s27
    %s30 = ssub.s32 %s18, %s25
    %p31 = scmp.eq.s32.totalorder %s30, 0
    %s33 = sadd.s32 %s32, 1
    %s34 = scalar_select %p31, %s32, %s33
    %p37 = pneg %p31
    %p38 = scmp.eq.s32.totalorder %s10, 1
    %p39 = por %p37, %p38
    %p40 = scmp.ne.s32.totalorder %s32, %s35
    %p41 = scmp.eq.s32.totalorder %s10, 0
    %p42 = por %p40, %p41
    %p43 = scmp.ne.s32.totalorder %s32, %s35
    %p44 = scmp.eq.s32.totalorder %s15, 1
    %p45 = por %p43, %p44
    %p46 = scmp.ne.s32.totalorder %s35, %s36
    %p47 = scmp.eq.s32.totalorder %s15, 0
    %p48 = por %p46, %p47
    %p49 = scmp.ne.s32.totalorder %s35, %s36
    %p50 = scmp.eq.s32.totalorder %s16, 1
    %p51 = por %p49, %p50
    %p53 = scmp.ne.s32.totalorder %s36, %s52
    %p54 = scmp.eq.s32.totalorder %s16, 0
    %p55 = por %p53, %p54
    %s56 = ssub.s32 %s17, %s29
    %p57 = scmp.eq.s32.totalorder %s56, 0
    %s59 = sadd.s32 %s58, 1
    %s60 = scalar_select %p57, %s58, %s59
    %p63 = pneg %p57
    %p64 = scmp.eq.s32.totalorder %s10, 1
    %p65 = por %p63, %p64
    %p66 = scmp.ne.s32.totalorder %s58, %s61
    %p67 = scmp.eq.s32.totalorder %s10, 0
    %p68 = por %p66, %p67
    %p69 = scmp.ne.s32.totalorder %s58, %s61
    %p70 = scmp.eq.s32.totalorder %s15, 1
    %p71 = por %p69, %p70
    %p72 = scmp.ne.s32.totalorder %s61, %s62
    %p73 = scmp.eq.s32.totalorder %s15, 0
    %p74 = por %p72, %p73
    %p75 = scmp.ne.s32.totalorder %s61, %s62
    %p76 = scmp.eq.s32.totalorder %s16, 1
    %p77 = por %p75, %p76
    %p79 = scmp.ne.s32.totalorder %s62, %s78
    %p80 = scmp.eq.s32.totalorder %s16, 0
    %p81 = por %p79, %p80
    %s82 = ssub.s32 %s17, %s29
    %p83 = scmp.eq.s32.totalorder %s82, 0
    %s85 = sadd.s32 %s84, 1
    %s86 = scalar_select %p83, %s84, %s85
    %p89 = pneg %p83
    %p90 = scmp.eq.s32.totalorder %s10, 1
    %p91 = por %p89, %p90
    %p92 = scmp.ne.s32.totalorder %s84, %s87
    %p93 = scmp.eq.s32.totalorder %s10, 0
    %p94 = por %p92, %p93
    %p95 = scmp.ne.s32.totalorder %s84, %s87
    %p96 = scmp.eq.s32.totalorder %s15, 1
    %p97 = por %p95, %p96
    %p98 = scmp.ne.s32.totalorder %s87, %s88
    %p99 = scmp.eq.s32.totalorder %s15, 0
    %p100 = por %p98, %p99
    %p101 = scmp.ne.s32.totalorder %s87, %s88
    %p102 = scmp.eq.s32.totalorder %s16, 1
    %p103 = por %p101, %p102
    %p105 = scmp.ne.s32.totalorder %s88, %s104
    %p106 = scmp.eq.s32.totalorder %s16, 0
    %p107 = por %p105, %p106
    %s108 = ssub.s32 %s17, %s29
    %p109 = scmp.eq.s32.totalorder %s108, 0
    %s111 = sadd.s32 %s110, 1
    %s112 = scalar_select %p109, %s110, %s111
    %p115 = pneg %p109
    %p116 = scmp.eq.s32.totalorder %s10, 1
    %p117 = por %p115, %p116
    %p118 = scmp.ne.s32.totalorder %s110, %s113
    %p119 = scmp.eq.s32.totalorder %s10, 0
    %p120 = por %p118, %p119
    %p121 = scmp.ne.s32.totalorder %s110, %s113
    %p122 = scmp.eq.s32.totalorder %s15, 1
    %p123 = por %p121, %p122
    %p124 = scmp.ne.s32.totalorder %s113, %s114
    %p125 = scmp.eq.s32.totalorder %s15, 0
    %p126 = por %p124, %p125
    %p127 = scmp.ne.s32.totalorder %s113, %s114
    %p128 = scmp.eq.s32.totalorder %s16, 1
    %p129 = por %p127, %p128
    %p131 = scmp.ne.s32.totalorder %s114, %s130
    %p132 = scmp.eq.s32.totalorder %s16, 0
    %p133 = por %p131, %p132
    %s134 = ssub.s32 %s18, %s25
    %s135 = ssub.s32 %s17, %s29
    %s136 = sor.u32 %s134, %s135
    %p137 = scmp.eq.s32.totalorder %s136, 0
    %s139 = sadd.s32 %s138, 1
    %s140 = scalar_select %p137, %s138, %s139
    %p143 = pneg %p137
    %p144 = scmp.eq.s32.totalorder %s10, 1
    %p145 = por %p143, %p144
    %p146 = scmp.ne.s32.totalorder %s138, %s141
    %p147 = scmp.eq.s32.totalorder %s10, 0
    %p148 = por %p146, %p147
    %p149 = scmp.ne.s32.totalorder %s138, %s141
    %p150 = scmp.eq.s32.totalorder %s15, 1
    %p151 = por %p149, %p150
    %p152 = scmp.ne.s32.totalorder %s141, %s142
    %p153 = scmp.eq.s32.totalorder %s15, 0
    %p154 = por %p152, %p153
    %p155 = scmp.ne.s32.totalorder %s141, %s142
    %p156 = scmp.eq.s32.totalorder %s16, 1
    %p157 = por %p155, %p156
    %p159 = scmp.ne.s32.totalorder %s142, %s158
    %p160 = scmp.eq.s32.totalorder %s16, 0
    %p161 = por %p159, %p160
    %p162 = scmp.le.s32.totalorder 1, %s10
    %p163 = scmp.lt.s32.totalorder %s10, 3
    %p164 = pnand %p162, %p163
    %p165 = pneg %p164
    // Predicated region
    $region9: #{conv_bn_silu.1} parent=5 // pred_check
      _
    $region10: #{conv_bn_silu.1} parent=5 // pred_check_branch
      %167 = sbr.rel (%p164) target = $region12
    $region11: #{conv_bn_silu.1} parent=5 // pred_region
      %s168 = ssub.s32 %s10, 1
      // Predicated region
      $region13: #{conv_bn_silu.1} parent=11 // pred_check
        %p169 = pneg %p74
      $region14: #{conv_bn_silu.1} parent=11 // pred_check_branch
        %171 = sbr.rel (%p169) target = $region16
      $region15: #{conv_bn_silu.1} parent=11 // pred_region
        %p172 = scmp.lt.s32.totalorder %s19, 0
        %s173 = scalar_select %p172, %s19, 0
        %s174 = smul.addr %s173, 4
        %s175 = scalar_lea.vmem %s1, %s174
      $region16: #{conv_bn_silu.1} parent=11 // pred_fallthru
        _
      // Predicated region
      $region17: #{conv_bn_silu.1} parent=11 // pred_check
        %p176 = pneg %p100
      $region18: #{conv_bn_silu.1} parent=11 // pred_check_branch
        %178 = sbr.rel (%p176) target = $region20
      $region19: #{conv_bn_silu.1} parent=11 // pred_region
        %p179 = scmp.lt.s32.totalorder %s19, 0
        %s180 = scalar_select %p179, %s19, 0
        %s181 = scalar_lea.vmem %s2, %s180
      $region20: #{conv_bn_silu.1} parent=11 // pred_fallthru
        _
      // Predicated region
      $region21: #{conv_bn_silu.1} parent=11 // pred_check
        %p182 = pneg %p126
      $region22: #{conv_bn_silu.1} parent=11 // pred_check_branch
        %184 = sbr.rel (%p182) target = $region24
      $region23: #{conv_bn_silu.1} parent=11 // pred_region
        %p185 = scmp.lt.s32.totalorder %s19, 0
        %s186 = scalar_select %p185, %s19, 0
        %s187 = scalar_lea.vmem %s3, %s186
      $region24: #{conv_bn_silu.1} parent=11 // pred_fallthru
        _
    $region12: #{conv_bn_silu.1} parent=5 // pred_fallthru
      _
    %p188 = scmp.lt.s32.totalorder %s10, 2
    // Predicated region
    $region25: #{conv_bn_silu.1} parent=5 // pred_check
      %p189 = pneg %p188
    $region26: #{conv_bn_silu.1} parent=5 // pred_check_branch
      %191 = sbr.rel (%p189) target = $region28
    $region27: #{conv_bn_silu.1} parent=5 // pred_region
      // Predicated region
      $region29: #{conv_bn_silu.1} parent=27 // pred_check
        %p192 = pneg %p42
      $region30: #{conv_bn_silu.1} parent=27 // pred_check_branch
        %194 = sbr.rel (%p192) target = $region32
      $region31: #{conv_bn_silu.1} parent=27 // pred_region
        %p195 = scmp.lt.s32.totalorder %s18, 1
        %s196 = scalar_select %p195, %s18, 1
        %s197 = smul.addr %s196, 54
        %s198 = smul.addr %s197, 4
        %s199 = scalar_lea.vmem %s0, %s198
      $region32: #{conv_bn_silu.1} parent=27 // pred_fallthru
        _
    $region28: #{conv_bn_silu.1} parent=5 // pred_fallthru
      _
    %p200 = scmp.le.s32.totalorder 1, %s10
    %p201 = scmp.lt.s32.totalorder %s10, 3
    %p202 = pnand %p200, %p201
    %p203 = pneg %p202
    // Predicated region
    $region33: #{conv_bn_silu.1} parent=5 // pred_check
      _
    $region34: #{conv_bn_silu.1} parent=5 // pred_check_branch
      %205 = sbr.rel (%p202) target = $region36
    $region35: #{conv_bn_silu.1} parent=5 // pred_region
      %s206 = ssub.s32 %s10, 1
      %p207 = scmp.lt.s32.totalorder %s20, 1
      %s208 = scalar_select %p207, %s20, 1
      %s209 = smul.addr %s208, 54
      %s210 = smul.addr %s209, 4
      %s211 = scalar_lea.vmem %s0, %s210
      %p212 = pneg %p48
      %p213 = pneg %p45
      %p214 = scmp.lt.s32.totalorder %s19, 0
      %s215 = scalar_select %p214, %s19, 0
      %s216 = smul.addr %s215, 4
      %s217 = scalar_lea.vmem %s1, %s216
      %p218 = pneg %p74
      %p219 = pneg %p71
      %p220 = scmp.lt.s32.totalorder %s19, 0
      %s221 = scalar_select %p220, %s19, 0
      %s222 = scalar_lea.vmem %s2, %s221
      %p223 = pneg %p100
      %p224 = pneg %p97
      %p225 = scmp.lt.s32.totalorder %s19, 0
      %s226 = scalar_select %p225, %s19, 0
      %s227 = scalar_lea.vmem %s3, %s226
      %p228 = pneg %p126
      %p229 = pneg %p123
      %p230 = pneg %p154
      %p231 = pneg %p151
      %s232 = smul.u32 32, %s20
      %p233 = scmp.lt.s32.totalorder %s232, 63
      %s234 = scalar_select %p233, %s232, 63
      %p235 = scmp.lt.s32.totalorder %s19, 0
      %s236 = scalar_select %p235, %s19, 0
      %s237 = sadd.s32 %s236, %s234
      %s238 = smul.addr %s237, 8
      %s239 = scalar_lea.vmem %s4, %s238
      %p240 = scmp.lt.s32.totalorder %s20, 1
      %s241 = scalar_select %p240, %s20, 1
      %s242 = smul.addr %s241, 54
      %s243 = smul.addr %s242, 4
      %s244 = scalar_lea.vmem %s0, %s243
      %p245 = scmp.lt.s32.totalorder %s19, 0
      %s246 = scalar_select %p245, %s19, 0
      %s247 = smul.addr %s246, 4
      %s248 = scalar_lea.vmem %s1, %s247
      %p249 = scmp.lt.s32.totalorder %s19, 0
      %s250 = scalar_select %p249, %s19, 0
      %s251 = scalar_lea.vmem %s2, %s250
      %p252 = scmp.lt.s32.totalorder %s19, 0
      %s253 = scalar_select %p252, %s19, 0
      %s254 = scalar_lea.vmem %s3, %s253
      %s255 = smul.u32 32, %s20
      %p256 = scmp.lt.s32.totalorder %s255, 63
      %s257 = scalar_select %p256, %s255, 63
      %p258 = scmp.lt.s32.totalorder %s19, 0
      %s259 = scalar_select %p258, %s19, 0
      %s260 = sadd.s32 %s259, %s257
      %s261 = smul.addr %s260, 8
      %s262 = scalar_lea.vmem %s4, %s261
      %s263 = smul.u32 32, %s20
      %v265 = vld [vmem:[%s244] sm:$0xf]
      %v266 = vld [vmem:[%s244 + $0x4] sm:$0xf]
      %v267 = vld [vmem:[%s244 + $0x8] sm:$0x1]
      %v268 = vld [vmem:[%s244 + $0xc] sm:$0xf]
      %v269 = vld [vmem:[%s244 + $0x10] sm:$0xf]
      %v270 = vld [vmem:[%s244 + $0x14] sm:$0x1]
      %v271 = vld [vmem:[%s244 + $0x18] sm:$0xf]
      %v272 = vld [vmem:[%s244 + $0x1c] sm:$0xf]
      %v273 = vld [vmem:[%s244 + $0x20] sm:$0x1]
      %v274 = vld [vmem:[%s244 + $0x24] sm:$0xf]
      %v275 = vld [vmem:[%s244 + $0x28] sm:$0xf]
      %v276 = vld [vmem:[%s244 + $0x2c] sm:$0x1]
      %v277 = vld [vmem:[%s244 + $0x30] sm:$0xf]
      %v278 = vld [vmem:[%s244 + $0x34] sm:$0xf]
      %v279 = vld [vmem:[%s244 + $0x38] sm:$0x1]
      %v280 = vld [vmem:[%s244 + $0x3c] sm:$0xf]
      %v281 = vld [vmem:[%s244 + $0x40] sm:$0xf]
      %v282 = vld [vmem:[%s244 + $0x44] sm:$0x1]
      %v283 = vld [vmem:[%s244 + $0x48] sm:$0xf]
      %v284 = vld [vmem:[%s244 + $0x4c] sm:$0xf]
      %v285 = vld [vmem:[%s244 + $0x50] sm:$0x1]
      %v286 = vld [vmem:[%s244 + $0x54] sm:$0xf]
      %v287 = vld [vmem:[%s244 + $0x58] sm:$0xf]
      %v288 = vld [vmem:[%s244 + $0x5c] sm:$0x1]
      %v289 = vld [vmem:[%s244 + $0x60] sm:$0xf]
      %v290 = vld [vmem:[%s244 + $0x64] sm:$0xf]
      %v291 = vld [vmem:[%s244 + $0x68] sm:$0x1]
      %v292 = vld [vmem:[%s244 + $0x6c] sm:$0xf]
      %v293 = vld [vmem:[%s244 + $0x70] sm:$0xf]
      %v294 = vld [vmem:[%s244 + $0x74] sm:$0x1]
      %v295 = vld [vmem:[%s244 + $0x78] sm:$0xf]
      %v296 = vld [vmem:[%s244 + $0x7c] sm:$0xf]
      %v297 = vld [vmem:[%s244 + $0x80] sm:$0x1]
      %v298 = vld [vmem:[%s244 + $0x84] sm:$0xf]
      %v299 = vld [vmem:[%s244 + $0x88] sm:$0xf]
      %v300 = vld [vmem:[%s244 + $0x8c] sm:$0x1]
      %v301 = vld [vmem:[%s244 + $0x90] sm:$0xf]
      %v302 = vld [vmem:[%s244 + $0x94] sm:$0xf]
      %v303 = vld [vmem:[%s244 + $0x98] sm:$0x1]
      %v304 = vld [vmem:[%s244 + $0x9c] sm:$0xf]
      %v305 = vld [vmem:[%s244 + $0xa0] sm:$0xf]
      %v306 = vld [vmem:[%s244 + $0xa4] sm:$0x1]
      %v307 = vld [vmem:[%s244 + $0xa8] sm:$0xf]
      %v308 = vld [vmem:[%s244 + $0xac] sm:$0xf]
      %v309 = vld [vmem:[%s244 + $0xb0] sm:$0x1]
      %v310 = vld [vmem:[%s244 + $0xb4] sm:$0xf]
      %v311 = vld [vmem:[%s244 + $0xb8] sm:$0xf]
      %v312 = vld [vmem:[%s244 + $0xbc] sm:$0x1]
      %v313 = vld [vmem:[%s244 + $0xc0] sm:$0xf]
      %v314 = vld [vmem:[%s244 + $0xc4] sm:$0xf]
      %v315 = vld [vmem:[%s244 + $0xc8] sm:$0x1]
      %v316 = vld [vmem:[%s244 + $0xcc] sm:$0xf]
      %v317 = vld [vmem:[%s244 + $0xd0] sm:$0xf]
      %v318 = vld [vmem:[%s244 + $0xd4] sm:$0x1]
      %v351 = vunpack.c.l.b16 %v265
      %v352 = vunpack.c.l.b16 %v266
      %v353 = vunpack.c.l.b16 %v268
      %v354 = vunpack.c.l.b16 %v269
      %v355 = vunpack.c.l.b16 %v271
      %v356 = vunpack.c.l.b16 %v272
      %v357 = vunpack.c.l.b16 %v274
      %v358 = vunpack.c.l.b16 %v275
      %v359 = vunpack.c.l.b16 %v277
      %v360 = vunpack.c.l.b16 %v278
      %v361 = vunpack.c.l.b16 %v280
      %v362 = vunpack.c.l.b16 %v281
      %v363 = vunpack.c.l.b16 %v283
      %v364 = vunpack.c.l.b16 %v284
      %v365 = vunpack.c.l.b16 %v286
      %v366 = vunpack.c.l.b16 %v287
      %v367 = vunpack.c.l.b16 %v289
      %v368 = vunpack.c.l.b16 %v290
      %v369 = vunpack.c.l.b16 %v292
      %v370 = vunpack.c.l.b16 %v293
      %v371 = vunpack.c.l.b16 %v295
      %v372 = vunpack.c.l.b16 %v296
      %v373 = vunpack.c.l.b16 %v298
      %v374 = vunpack.c.l.b16 %v299
      %v375 = vunpack.c.l.b16 %v301
      %v376 = vunpack.c.l.b16 %v302
      %v377 = vunpack.c.l.b16 %v304
      %v378 = vunpack.c.l.b16 %v305
      %v379 = vunpack.c.l.b16 %v307
      %v380 = vunpack.c.l.b16 %v308
      %v381 = vunpack.c.l.b16 %v310
      %v382 = vunpack.c.l.b16 %v311
      %v383 = vpack.c.b16 %v352, %v351
      %v384 = vpack.c.b16 %v354, %v353
      %v385 = vpack.c.b16 %v356, %v355
      %v386 = vpack.c.b16 %v358, %v357
      %v387 = vpack.c.b16 %v360, %v359
      %v388 = vpack.c.b16 %v362, %v361
      %v389 = vpack.c.b16 %v364, %v363
      %v390 = vpack.c.b16 %v366, %v365
      %v391 = vpack.c.b16 %v368, %v367
      %v392 = vpack.c.b16 %v370, %v369
      %v393 = vpack.c.b16 %v372, %v371
      %v394 = vpack.c.b16 %v374, %v373
      %v395 = vpack.c.b16 %v376, %v375
      %v396 = vpack.c.b16 %v378, %v377
      %v397 = vpack.c.b16 %v380, %v379
      %v398 = vpack.c.b16 %v382, %v381
      %v415 = vunpack.c.l.b16 %v267
      %v416 = vunpack.c.l.b16 %v270
      %v417 = vunpack.c.l.b16 %v273
      %v418 = vunpack.c.l.b16 %v276
      %v419 = vunpack.c.l.b16 %v279
      %v420 = vunpack.c.l.b16 %v282
      %v421 = vunpack.c.l.b16 %v285
      %v422 = vunpack.c.l.b16 %v288
      %v423 = vunpack.c.l.b16 %v291
      %v424 = vunpack.c.l.b16 %v294
      %v425 = vunpack.c.l.b16 %v297
      %v426 = vunpack.c.l.b16 %v300
      %v427 = vunpack.c.l.b16 %v303
      %v428 = vunpack.c.l.b16 %v306
      %v429 = vunpack.c.l.b16 %v309
      %v430 = vunpack.c.l.b16 %v312
      %v431 = vpack.c.b16 %v415, %v415
      %v432 = vpack.c.b16 %v416, %v416
      %v433 = vpack.c.b16 %v417, %v417
      %v434 = vpack.c.b16 %v418, %v418
      %v435 = vpack.c.b16 %v419, %v419
      %v436 = vpack.c.b16 %v420, %v420
      %v437 = vpack.c.b16 %v421, %v421
      %v438 = vpack.c.b16 %v422, %v422
      %v439 = vpack.c.b16 %v423, %v423
      %v440 = vpack.c.b16 %v424, %v424
      %v441 = vpack.c.b16 %v425, %v425
      %v442 = vpack.c.b16 %v426, %v426
      %v443 = vpack.c.b16 %v427, %v427
      %v444 = vpack.c.b16 %v428, %v428
      %v445 = vpack.c.b16 %v429, %v429
      %v446 = vpack.c.b16 %v430, %v430
      %vm447 = vsmask.f32 7424
      %v449 = vshrl.u32 %v383, 16
      %v451 = vshll.u32 %v383, 16
      %v453 = vrot.slane %v451, 1
      %v454 = vor.u32 %v449, %v453
      %v456 = vshll.u32 %v431, 16
      %v458 = vrot.slane %v456, 1
      %v459 = vsel %vm447, %v454, %v458
      %v461 = vshrl.u32 %v384, 16
      %v463 = vshll.u32 %v384, 16
      %v465 = vrot.slane %v463, 1
      %v466 = vor.u32 %v461, %v465
      %v468 = vshll.u32 %v432, 16
      %v470 = vrot.slane %v468, 1
      %v471 = vsel %vm447, %v466, %v470
      %v473 = vshrl.u32 %v385, 16
      %v475 = vshll.u32 %v385, 16
      %v477 = vrot.slane %v475, 1
      %v478 = vor.u32 %v473, %v477
      %v480 = vshll.u32 %v433, 16
      %v482 = vrot.slane %v480, 1
      %v483 = vsel %vm447, %v478, %v482
      %v485 = vshrl.u32 %v386, 16
      %v487 = vshll.u32 %v386, 16
      %v489 = vrot.slane %v487, 1
      %v490 = vor.u32 %v485, %v489
      %v492 = vshll.u32 %v434, 16
      %v494 = vrot.slane %v492, 1
      %v495 = vsel %vm447, %v490, %v494
      %v497 = vshrl.u32 %v387, 16
      %v499 = vshll.u32 %v387, 16
      %v501 = vrot.slane %v499, 1
      %v502 = vor.u32 %v497, %v501
      %v504 = vshll.u32 %v435, 16
      %v506 = vrot.slane %v504, 1
      %v507 = vsel %vm447, %v502, %v506
      %v509 = vshrl.u32 %v388, 16
      %v511 = vshll.u32 %v388, 16
      %v513 = vrot.slane %v511, 1
      %v514 = vor.u32 %v509, %v513
      %v516 = vshll.u32 %v436, 16
      %v518 = vrot.slane %v516, 1
      %v519 = vsel %vm447, %v514, %v518
      %v521 = vshrl.u32 %v389, 16
      %v523 = vshll.u32 %v389, 16
      %v525 = vrot.slane %v523, 1
      %v526 = vor.u32 %v521, %v525
      %v528 = vshll.u32 %v437, 16
      %v530 = vrot.slane %v528, 1
      %v531 = vsel %vm447, %v526, %v530
      %v533 = vshrl.u32 %v390, 16
      %v535 = vshll.u32 %v390, 16
      %v537 = vrot.slane %v535, 1
      %v538 = vor.u32 %v533, %v537
      %v540 = vshll.u32 %v438, 16
      %v542 = vrot.slane %v540, 1
      %v543 = vsel %vm447, %v538, %v542
      %v545 = vshrl.u32 %v391, 16
      %v547 = vshll.u32 %v391, 16
      %v549 = vrot.slane %v547, 1
      %v550 = vor.u32 %v545, %v549
      %v552 = vshll.u32 %v439, 16
      %v554 = vrot.slane %v552, 1
      %v555 = vsel %vm447, %v550, %v554
      %v557 = vshrl.u32 %v392, 16
      %v559 = vshll.u32 %v392, 16
      %v561 = vrot.slane %v559, 1
      %v562 = vor.u32 %v557, %v561
      %v564 = vshll.u32 %v440, 16
      %v566 = vrot.slane %v564, 1
      %v567 = vsel %vm447, %v562, %v566
      %v569 = vshrl.u32 %v393, 16
      %v571 = vshll.u32 %v393, 16
      %v573 = vrot.slane %v571, 1
      %v574 = vor.u32 %v569, %v573
      %v576 = vshll.u32 %v441, 16
      %v578 = vrot.slane %v576, 1
      %v579 = vsel %vm447, %v574, %v578
      %v581 = vshrl.u32 %v394, 16
      %v583 = vshll.u32 %v394, 16
      %v585 = vrot.slane %v583, 1
      %v586 = vor.u32 %v581, %v585
      %v588 = vshll.u32 %v442, 16
      %v590 = vrot.slane %v588, 1
      %v591 = vsel %vm447, %v586, %v590
      %v593 = vshrl.u32 %v395, 16
      %v595 = vshll.u32 %v395, 16
      %v597 = vrot.slane %v595, 1
      %v598 = vor.u32 %v593, %v597
      %v600 = vshll.u32 %v443, 16
      %v602 = vrot.slane %v600, 1
      %v603 = vsel %vm447, %v598, %v602
      %v605 = vshrl.u32 %v396, 16
      %v607 = vshll.u32 %v396, 16
      %v609 = vrot.slane %v607, 1
      %v610 = vor.u32 %v605, %v609
      %v612 = vshll.u32 %v444, 16
      %v614 = vrot.slane %v612, 1
      %v615 = vsel %vm447, %v610, %v614
      %v617 = vshrl.u32 %v397, 16
      %v619 = vshll.u32 %v397, 16
      %v621 = vrot.slane %v619, 1
      %v622 = vor.u32 %v617, %v621
      %v624 = vshll.u32 %v445, 16
      %v626 = vrot.slane %v624, 1
      %v627 = vsel %vm447, %v622, %v626
      %v629 = vshrl.u32 %v398, 16
      %v631 = vshll.u32 %v398, 16
      %v633 = vrot.slane %v631, 1
      %v634 = vor.u32 %v629, %v633
      %v636 = vshll.u32 %v446, 16
      %v638 = vrot.slane %v636, 1
      %v639 = vsel %vm447, %v634, %v638
      %640 = vrot.lane.b32.xlu0 %v459, 4
      %v641 = vpop.permute.xlu0 %640
      %642 = vrot.lane.b32.xlu0 %v471, 4
      %v643 = vpop.permute.xlu0 %642
      %644 = vrot.lane.b32.xlu0 %v483, 4
      %v645 = vpop.permute.xlu0 %644
      %646 = vrot.lane.b32.xlu0 %v495, 4
      %v647 = vpop.permute.xlu0 %646
      %648 = vrot.lane.b32.xlu0 %v507, 4
      %v649 = vpop.permute.xlu0 %648
      %650 = vrot.lane.b32.xlu0 %v519, 4
      %v651 = vpop.permute.xlu0 %650
      %652 = vrot.lane.b32.xlu0 %v531, 4
      %v653 = vpop.permute.xlu0 %652
      %654 = vrot.lane.b32.xlu0 %v543, 4
      %v655 = vpop.permute.xlu0 %654
      %656 = vrot.lane.b32.xlu0 %v555, 4
      %v657 = vpop.permute.xlu0 %656
      %658 = vrot.lane.b32.xlu0 %v567, 4
      %v659 = vpop.permute.xlu0 %658
      %660 = vrot.lane.b32.xlu0 %v579, 4
      %v661 = vpop.permute.xlu0 %660
      %662 = vrot.lane.b32.xlu0 %v591, 4
      %v663 = vpop.permute.xlu0 %662
      %664 = vrot.lane.b32.xlu0 %v603, 4
      %v665 = vpop.permute.xlu0 %664
      %666 = vrot.lane.b32.xlu0 %v615, 4
      %v667 = vpop.permute.xlu0 %666
      %668 = vrot.lane.b32.xlu0 %v627, 4
      %v669 = vpop.permute.xlu0 %668
      %670 = vrot.lane.b32.xlu0 %v639, 4
      %v671 = vpop.permute.xlu0 %670
      %vm672 = vcmask 1046528
      %v673 = vrot.slane %v383, 1
      %v674 = vrot.slane %v431, 1
      %v675 = vsel %vm672, %v673, %v674
      %v676 = vrot.slane %v384, 1
      %v677 = vrot.slane %v432, 1
      %v678 = vsel %vm672, %v676, %v677
      %v679 = vrot.slane %v385, 1
      %v680 = vrot.slane %v433, 1
      %v681 = vsel %vm672, %v679, %v680
      %v682 = vrot.slane %v386, 1
      %v683 = vrot.slane %v434, 1
      %v684 = vsel %vm672, %v682, %v683
      %v685 = vrot.slane %v387, 1
      %v686 = vrot.slane %v435, 1
      %v687 = vsel %vm672, %v685, %v686
      %v688 = vrot.slane %v388, 1
      %v689 = vrot.slane %v436, 1
      %v690 = vsel %vm672, %v688, %v689
      %v691 = vrot.slane %v389, 1
      %v692 = vrot.slane %v437, 1
      %v693 = vsel %vm672, %v691, %v692
      %v694 = vrot.slane %v390, 1
      %v695 = vrot.slane %v438, 1
      %v696 = vsel %vm672, %v694, %v695
      %v697 = vrot.slane %v391, 1
      %v698 = vrot.slane %v439, 1
      %v699 = vsel %vm672, %v697, %v698
      %v700 = vrot.slane %v392, 1
      %v701 = vrot.slane %v440, 1
      %v702 = vsel %vm672, %v700, %v701
      %v703 = vrot.slane %v393, 1
      %v704 = vrot.slane %v441, 1
      %v705 = vsel %vm672, %v703, %v704
      %v706 = vrot.slane %v394, 1
      %v707 = vrot.slane %v442, 1
      %v708 = vsel %vm672, %v706, %v707
      %v709 = vrot.slane %v395, 1
      %v710 = vrot.slane %v443, 1
      %v711 = vsel %vm672, %v709, %v710
      %v712 = vrot.slane %v396, 1
      %v713 = vrot.slane %v444, 1
      %v714 = vsel %vm672, %v712, %v713
      %v715 = vrot.slane %v397, 1
      %v716 = vrot.slane %v445, 1
      %v717 = vsel %vm672, %v715, %v716
      %v718 = vrot.slane %v398, 1
      %v719 = vrot.slane %v446, 1
      %v720 = vsel %vm672, %v718, %v719
      %721 = vrot.lane.b32.xlu0 %v675, 8
      %v722 = vpop.permute.xlu0 %721
      %723 = vrot.lane.b32.xlu0 %v678, 8
      %v724 = vpop.permute.xlu0 %723
      %725 = vrot.lane.b32.xlu0 %v681, 8
      %v726 = vpop.permute.xlu0 %725
      %727 = vrot.lane.b32.xlu0 %v684, 8
      %v728 = vpop.permute.xlu0 %727
      %729 = vrot.lane.b32.xlu0 %v687, 8
      %v730 = vpop.permute.xlu0 %729
      %731 = vrot.lane.b32.xlu0 %v690, 8
      %v732 = vpop.permute.xlu0 %731
      %733 = vrot.lane.b32.xlu0 %v693, 8
      %v734 = vpop.permute.xlu0 %733
      %735 = vrot.lane.b32.xlu0 %v696, 8
      %v736 = vpop.permute.xlu0 %735
      %737 = vrot.lane.b32.xlu0 %v699, 8
      %v738 = vpop.permute.xlu0 %737
      %739 = vrot.lane.b32.xlu0 %v702, 8
      %v740 = vpop.permute.xlu0 %739
      %741 = vrot.lane.b32.xlu0 %v705, 8
      %v742 = vpop.permute.xlu0 %741
      %743 = vrot.lane.b32.xlu0 %v708, 8
      %v744 = vpop.permute.xlu0 %743
      %745 = vrot.lane.b32.xlu0 %v711, 8
      %v746 = vpop.permute.xlu0 %745
      %747 = vrot.lane.b32.xlu0 %v714, 8
      %v748 = vpop.permute.xlu0 %747
      %749 = vrot.lane.b32.xlu0 %v717, 8
      %v750 = vpop.permute.xlu0 %749
      %751 = vrot.lane.b32.xlu0 %v720, 8
      %v752 = vpop.permute.xlu0 %751
      %v755 = vunpack.c.l.b16 %v313
      %v756 = vunpack.c.l.b16 %v314
      %v757 = vpack.c.b16 %v756, %v755
      %758 = vrot.lane.b32.xlu0 %v384, 12
      %v759 = vpop.permute.xlu0 %758
      %760 = vrot.lane.b32.xlu0 %v385, 12
      %v761 = vpop.permute.xlu0 %760
      %762 = vrot.lane.b32.xlu0 %v386, 12
      %v763 = vpop.permute.xlu0 %762
      %764 = vrot.lane.b32.xlu0 %v387, 12
      %v765 = vpop.permute.xlu0 %764
      %766 = vrot.lane.b32.xlu0 %v388, 12
      %v767 = vpop.permute.xlu0 %766
      %768 = vrot.lane.b32.xlu0 %v389, 12
      %v769 = vpop.permute.xlu0 %768
      %770 = vrot.lane.b32.xlu0 %v390, 12
      %v771 = vpop.permute.xlu0 %770
      %772 = vrot.lane.b32.xlu0 %v391, 12
      %v773 = vpop.permute.xlu0 %772
      %774 = vrot.lane.b32.xlu0 %v392, 12
      %v775 = vpop.permute.xlu0 %774
      %776 = vrot.lane.b32.xlu0 %v393, 12
      %v777 = vpop.permute.xlu0 %776
      %778 = vrot.lane.b32.xlu0 %v394, 12
      %v779 = vpop.permute.xlu0 %778
      %780 = vrot.lane.b32.xlu0 %v395, 12
      %v781 = vpop.permute.xlu0 %780
      %782 = vrot.lane.b32.xlu0 %v396, 12
      %v783 = vpop.permute.xlu0 %782
      %784 = vrot.lane.b32.xlu0 %v397, 12
      %v785 = vpop.permute.xlu0 %784
      %786 = vrot.lane.b32.xlu0 %v398, 12
      %v787 = vpop.permute.xlu0 %786
      %788 = vrot.lane.b32.xlu0 %v757, 12
      %v789 = vpop.permute.xlu0 %788
      %v791 = vunpack.c.l.b16 %v315
      %v792 = vpack.c.b16 %v791, %v791
      %v794 = vshrl.u32 %v757, 16
      %v796 = vshll.u32 %v757, 16
      %v798 = vrot.slane %v796, 1
      %v799 = vor.u32 %v794, %v798
      %v801 = vshll.u32 %v792, 16
      %v803 = vrot.slane %v801, 1
      %v804 = vsel %vm447, %v799, %v803
      %805 = vrot.lane.b32.xlu0 %v471, 16
      %v806 = vpop.permute.xlu0 %805
      %807 = vrot.lane.b32.xlu0 %v483, 16
      %v808 = vpop.permute.xlu0 %807
      %809 = vrot.lane.b32.xlu0 %v495, 16
      %v810 = vpop.permute.xlu0 %809
      %811 = vrot.lane.b32.xlu0 %v507, 16
      %v812 = vpop.permute.xlu0 %811
      %813 = vrot.lane.b32.xlu0 %v519, 16
      %v814 = vpop.permute.xlu0 %813
      %815 = vrot.lane.b32.xlu0 %v531, 16
      %v816 = vpop.permute.xlu0 %815
      %817 = vrot.lane.b32.xlu0 %v543, 16
      %v818 = vpop.permute.xlu0 %817
      %819 = vrot.lane.b32.xlu0 %v555, 16
      %v820 = vpop.permute.xlu0 %819
      %821 = vrot.lane.b32.xlu0 %v567, 16
      %v822 = vpop.permute.xlu0 %821
      %823 = vrot.lane.b32.xlu0 %v579, 16
      %v824 = vpop.permute.xlu0 %823
      %825 = vrot.lane.b32.xlu0 %v591, 16
      %v826 = vpop.permute.xlu0 %825
      %827 = vrot.lane.b32.xlu0 %v603, 16
      %v828 = vpop.permute.xlu0 %827
      %829 = vrot.lane.b32.xlu0 %v615, 16
      %v830 = vpop.permute.xlu0 %829
      %831 = vrot.lane.b32.xlu0 %v627, 16
      %v832 = vpop.permute.xlu0 %831
      %833 = vrot.lane.b32.xlu0 %v639, 16
      %v834 = vpop.permute.xlu0 %833
      %835 = vrot.lane.b32.xlu0 %v804, 16
      %v836 = vpop.permute.xlu0 %835
      %v837 = vrot.slane %v757, 1
      %v838 = vrot.slane %v792, 1
      %v839 = vsel %vm672, %v837, %v838
      %840 = vrot.lane.b32.xlu0 %v678, 20
      %v841 = vpop.permute.xlu0 %840
      %842 = vrot.lane.b32.xlu0 %v681, 20
      %v843 = vpop.permute.xlu0 %842
      %844 = vrot.lane.b32.xlu0 %v684, 20
      %v845 = vpop.permute.xlu0 %844
      %846 = vrot.lane.b32.xlu0 %v687, 20
      %v847 = vpop.permute.xlu0 %846
      %848 = vrot.lane.b32.xlu0 %v690, 20
      %v849 = vpop.permute.xlu0 %848
      %850 = vrot.lane.b32.xlu0 %v693, 20
      %v851 = vpop.permute.xlu0 %850
      %852 = vrot.lane.b32.xlu0 %v696, 20
      %v853 = vpop.permute.xlu0 %852
      %854 = vrot.lane.b32.xlu0 %v699, 20
      %v855 = vpop.permute.xlu0 %854
      %856 = vrot.lane.b32.xlu0 %v702, 20
      %v857 = vpop.permute.xlu0 %856
      %858 = vrot.lane.b32.xlu0 %v705, 20
      %v859 = vpop.permute.xlu0 %858
      %860 = vrot.lane.b32.xlu0 %v708, 20
      %v861 = vpop.permute.xlu0 %860
      %862 = vrot.lane.b32.xlu0 %v711, 20
      %v863 = vpop.permute.xlu0 %862
      %864 = vrot.lane.b32.xlu0 %v714, 20
      %v865 = vpop.permute.xlu0 %864
      %866 = vrot.lane.b32.xlu0 %v717, 20
      %v867 = vpop.permute.xlu0 %866
      %868 = vrot.lane.b32.xlu0 %v720, 20
      %v869 = vpop.permute.xlu0 %868
      %870 = vrot.lane.b32.xlu0 %v839, 20
      %v871 = vpop.permute.xlu0 %870
      %v874 = vunpack.c.l.b16 %v316
      %v875 = vunpack.c.l.b16 %v317
      %v876 = vpack.c.b16 %v875, %v874
      %877 = vrot.lane.b32.xlu0 %v385, 24
      %v878 = vpop.permute.xlu0 %877
      %879 = vrot.lane.b32.xlu0 %v386, 24
      %v880 = vpop.permute.xlu0 %879
      %881 = vrot.lane.b32.xlu0 %v387, 24
      %v882 = vpop.permute.xlu0 %881
      %883 = vrot.lane.b32.xlu0 %v388, 24
      %v884 = vpop.permute.xlu0 %883
      %885 = vrot.lane.b32.xlu0 %v389, 24
      %v886 = vpop.permute.xlu0 %885
      %887 = vrot.lane.b32.xlu0 %v390, 24
      %v888 = vpop.permute.xlu0 %887
      %889 = vrot.lane.b32.xlu0 %v391, 24
      %v890 = vpop.permute.xlu0 %889
      %891 = vrot.lane.b32.xlu0 %v392, 24
      %v892 = vpop.permute.xlu0 %891
      %893 = vrot.lane.b32.xlu0 %v393, 24
      %v894 = vpop.permute.xlu0 %893
      %895 = vrot.lane.b32.xlu0 %v394, 24
      %v896 = vpop.permute.xlu0 %895
      %897 = vrot.lane.b32.xlu0 %v395, 24
      %v898 = vpop.permute.xlu0 %897
      %899 = vrot.lane.b32.xlu0 %v396, 24
      %v900 = vpop.permute.xlu0 %899
      %901 = vrot.lane.b32.xlu0 %v397, 24
      %v902 = vpop.permute.xlu0 %901
      %903 = vrot.lane.b32.xlu0 %v398, 24
      %v904 = vpop.permute.xlu0 %903
      %905 = vrot.lane.b32.xlu0 %v757, 24
      %v906 = vpop.permute.xlu0 %905
      %907 = vrot.lane.b32.xlu0 %v876, 24
      %v908 = vpop.permute.xlu0 %907
      %v910 = vunpack.c.l.b16 %v318
      %v911 = vpack.c.b16 %v910, %v910
      %v913 = vshrl.u32 %v876, 16
      %v915 = vshll.u32 %v876, 16
      %v917 = vrot.slane %v915, 1
      %v918 = vor.u32 %v913, %v917
      %v920 = vshll.u32 %v911, 16
      %v922 = vrot.slane %v920, 1
      %v923 = vsel %vm447, %v918, %v922
      %924 = vrot.lane.b32.xlu0 %v483, 28
      %v925 = vpop.permute.xlu0 %924
      %926 = vrot.lane.b32.xlu0 %v495, 28
      %v927 = vpop.permute.xlu0 %926
      %928 = vrot.lane.b32.xlu0 %v507, 28
      %v929 = vpop.permute.xlu0 %928
      %930 = vrot.lane.b32.xlu0 %v519, 28
      %v931 = vpop.permute.xlu0 %930
      %932 = vrot.lane.b32.xlu0 %v531, 28
      %v933 = vpop.permute.xlu0 %932
      %934 = vrot.lane.b32.xlu0 %v543, 28
      %v935 = vpop.permute.xlu0 %934
      %936 = vrot.lane.b32.xlu0 %v555, 28
      %v937 = vpop.permute.xlu0 %936
      %938 = vrot.lane.b32.xlu0 %v567, 28
      %v939 = vpop.permute.xlu0 %938
      %940 = vrot.lane.b32.xlu0 %v579, 28
      %v941 = vpop.permute.xlu0 %940
      %942 = vrot.lane.b32.xlu0 %v591, 28
      %v943 = vpop.permute.xlu0 %942
      %944 = vrot.lane.b32.xlu0 %v603, 28
      %v945 = vpop.permute.xlu0 %944
      %946 = vrot.lane.b32.xlu0 %v615, 28
      %v947 = vpop.permute.xlu0 %946
      %948 = vrot.lane.b32.xlu0 %v627, 28
      %v949 = vpop.permute.xlu0 %948
      %950 = vrot.lane.b32.xlu0 %v639, 28
      %v951 = vpop.permute.xlu0 %950
      %952 = vrot.lane.b32.xlu0 %v804, 28
      %v953 = vpop.permute.xlu0 %952
      %954 = vrot.lane.b32.xlu0 %v923, 28
      %v955 = vpop.permute.xlu0 %954
      %v956 = vrot.slane %v876, 1
      %v957 = vrot.slane %v911, 1
      %v958 = vsel %vm672, %v956, %v957
      %959 = vrot.lane.b32.xlu0 %v681, 32
      %v960 = vpop.permute.xlu0 %959
      %961 = vrot.lane.b32.xlu0 %v684, 32
      %v962 = vpop.permute.xlu0 %961
      %963 = vrot.lane.b32.xlu0 %v687, 32
      %v964 = vpop.permute.xlu0 %963
      %965 = vrot.lane.b32.xlu0 %v690, 32
      %v966 = vpop.permute.xlu0 %965
      %967 = vrot.lane.b32.xlu0 %v693, 32
      %v968 = vpop.permute.xlu0 %967
      %969 = vrot.lane.b32.xlu0 %v696, 32
      %v970 = vpop.permute.xlu0 %969
      %971 = vrot.lane.b32.xlu0 %v699, 32
      %v972 = vpop.permute.xlu0 %971
      %973 = vrot.lane.b32.xlu0 %v702, 32
      %v974 = vpop.permute.xlu0 %973
      %975 = vrot.lane.b32.xlu0 %v705, 32
      %v976 = vpop.permute.xlu0 %975
      %977 = vrot.lane.b32.xlu0 %v708, 32
      %v978 = vpop.permute.xlu0 %977
      %979 = vrot.lane.b32.xlu0 %v711, 32
      %v980 = vpop.permute.xlu0 %979
      %981 = vrot.lane.b32.xlu0 %v714, 32
      %v982 = vpop.permute.xlu0 %981
      %983 = vrot.lane.b32.xlu0 %v717, 32
      %v984 = vpop.permute.xlu0 %983
      %985 = vrot.lane.b32.xlu0 %v720, 32
      %v986 = vpop.permute.xlu0 %985
      %987 = vrot.lane.b32.xlu0 %v839, 32
      %v988 = vpop.permute.xlu0 %987
      %989 = vrot.lane.b32.xlu0 %v958, 32
      %v990 = vpop.permute.xlu0 %989
      %vm991 = vcmask 31744
      %v993 = vsel %vm991, %v383, %v641
      %v995 = vsel %vm991, %v384, %v643
      %v997 = vsel %vm991, %v385, %v645
      %v999 = vsel %vm991, %v386, %v647
      %v1001 = vsel %vm991, %v387, %v649
      %v1003 = vsel %vm991, %v388, %v651
      %v1005 = vsel %vm991, %v389, %v653
      %v1007 = vsel %vm991, %v390, %v655
      %v1009 = vsel %vm991, %v391, %v657
      %v1011 = vsel %vm991, %v392, %v659
      %v1013 = vsel %vm991, %v393, %v661
      %v1015 = vsel %vm991, %v394, %v663
      %v1017 = vsel %vm991, %v395, %v665
      %v1019 = vsel %vm991, %v396, %v667
      %v1021 = vsel %vm991, %v397, %v669
      %v1023 = vsel %vm991, %v398, %v671
      %vm1024 = vcmask 64512
      %v1026 = vsel %vm1024, %v993, %v722
      %v1028 = vsel %vm1024, %v995, %v724
      %v1030 = vsel %vm1024, %v997, %v726
      %v1032 = vsel %vm1024, %v999, %v728
      %v1034 = vsel %vm1024, %v1001, %v730
      %v1036 = vsel %vm1024, %v1003, %v732
      %v1038 = vsel %vm1024, %v1005, %v734
      %v1040 = vsel %vm1024, %v1007, %v736
      %v1042 = vsel %vm1024, %v1009, %v738
      %v1044 = vsel %vm1024, %v1011, %v740
      %v1046 = vsel %vm1024, %v1013, %v742
      %v1048 = vsel %vm1024, %v1015, %v744
      %v1050 = vsel %vm1024, %v1017, %v746
      %v1052 = vsel %vm1024, %v1019, %v748
      %v1054 = vsel %vm1024, %v1021, %v750
      %v1056 = vsel %vm1024, %v1023, %v752
      %vm1057 = vcmask 97280
      %v1059 = vsel %vm1057, %v1026, %v759
      %v1061 = vsel %vm1057, %v1028, %v761
      %v1063 = vsel %vm1057, %v1030, %v763
      %v1065 = vsel %vm1057, %v1032, %v765
      %v1067 = vsel %vm1057, %v1034, %v767
      %v1069 = vsel %vm1057, %v1036, %v769
      %v1071 = vsel %vm1057, %v1038, %v771
      %v1073 = vsel %vm1057, %v1040, %v773
      %v1075 = vsel %vm1057, %v1042, %v775
      %v1077 = vsel %vm1057, %v1044, %v777
      %v1079 = vsel %vm1057, %v1046, %v779
      %v1081 = vsel %vm1057, %v1048, %v781
      %v1083 = vsel %vm1057, %v1050, %v783
      %v1085 = vsel %vm1057, %v1052, %v785
      %v1087 = vsel %vm1057, %v1054, %v787
      %v1089 = vsel %vm1057, %v1056, %v789
      %vm1090 = vcmask 130048
      %v1092 = vsel %vm1090, %v1059, %v806
      %v1094 = vsel %vm1090, %v1061, %v808
      %v1096 = vsel %vm1090, %v1063, %v810
      %v1098 = vsel %vm1090, %v1065, %v812
      %v1100 = vsel %vm1090, %v1067, %v814
      %v1102 = vsel %vm1090, %v1069, %v816
      %v1104 = vsel %vm1090, %v1071, %v818
      %v1106 = vsel %vm1090, %v1073, %v820
      %v1108 = vsel %vm1090, %v1075, %v822
      %v1110 = vsel %vm1090, %v1077, %v824
      %v1112 = vsel %vm1090, %v1079, %v826
      %v1114 = vsel %vm1090, %v1081, %v828
      %v1116 = vsel %vm1090, %v1083, %v830
      %v1118 = vsel %vm1090, %v1085, %v832
      %v1120 = vsel %vm1090, %v1087, %v834
      %v1122 = vsel %vm1090, %v1089, %v836
      %vm1123 = vcmask 162816
      %v1125 = vsel %vm1123, %v1092, %v841
      %v1127 = vsel %vm1123, %v1094, %v843
      %v1129 = vsel %vm1123, %v1096, %v845
      %v1131 = vsel %vm1123, %v1098, %v847
      %v1133 = vsel %vm1123, %v1100, %v849
      %v1135 = vsel %vm1123, %v1102, %v851
      %v1137 = vsel %vm1123, %v1104, %v853
      %v1139 = vsel %vm1123, %v1106, %v855
      %v1141 = vsel %vm1123, %v1108, %v857
      %v1143 = vsel %vm1123, %v1110, %v859
      %v1145 = vsel %vm1123, %v1112, %v861
      %v1147 = vsel %vm1123, %v1114, %v863
      %v1149 = vsel %vm1123, %v1116, %v865
      %v1151 = vsel %vm1123, %v1118, %v867
      %v1153 = vsel %vm1123, %v1120, %v869
      %v1155 = vsel %vm1123, %v1122, %v871
      %vm1156 = vcmask 195584
      %v1158 = vsel %vm1156, %v1125, %v878
      %v1160 = vsel %vm1156, %v1127, %v880
      %v1162 = vsel %vm1156, %v1129, %v882
      %v1164 = vsel %vm1156, %v1131, %v884
      %v1166 = vsel %vm1156, %v1133, %v886
      %v1168 = vsel %vm1156, %v1135, %v888
      %v1170 = vsel %vm1156, %v1137, %v890
      %v1172 = vsel %vm1156, %v1139, %v892
      %v1174 = vsel %vm1156, %v1141, %v894
      %v1176 = vsel %vm1156, %v1143, %v896
      %v1178 = vsel %vm1156, %v1145, %v898
      %v1180 = vsel %vm1156, %v1147, %v900
      %v1182 = vsel %vm1156, %v1149, %v902
      %v1184 = vsel %vm1156, %v1151, %v904
      %v1186 = vsel %vm1156, %v1153, %v906
      %v1188 = vsel %vm1156, %v1155, %v908
      %vm1189 = vcmask 228352
      %v1191 = vsel %vm1189, %v1158, %v925
      %v1193 = vsel %vm1189, %v1160, %v927
      %v1195 = vsel %vm1189, %v1162, %v929
      %v1197 = vsel %vm1189, %v1164, %v931
      %v1199 = vsel %vm1189, %v1166, %v933
      %v1201 = vsel %vm1189, %v1168, %v935
      %v1203 = vsel %vm1189, %v1170, %v937
      %v1205 = vsel %vm1189, %v1172, %v939
      %v1207 = vsel %vm1189, %v1174, %v941
      %v1209 = vsel %vm1189, %v1176, %v943
      %v1211 = vsel %vm1189, %v1178, %v945
      %v1213 = vsel %vm1189, %v1180, %v947
      %v1215 = vsel %vm1189, %v1182, %v949
      %v1217 = vsel %vm1189, %v1184, %v951
      %v1219 = vsel %vm1189, %v1186, %v953
      %v1221 = vsel %vm1189, %v1188, %v955
      %vm1222 = vcmask 261120
      %v1224 = vsel %vm1222, %v1191, %v960
      %v1226 = vsel %vm1222, %v1193, %v962
      %v1228 = vsel %vm1222, %v1195, %v964
      %v1230 = vsel %vm1222, %v1197, %v966
      %v1232 = vsel %vm1222, %v1199, %v968
      %v1234 = vsel %vm1222, %v1201, %v970
      %v1236 = vsel %vm1222, %v1203, %v972
      %v1238 = vsel %vm1222, %v1205, %v974
      %v1240 = vsel %vm1222, %v1207, %v976
      %v1242 = vsel %vm1222, %v1209, %v978
      %v1244 = vsel %vm1222, %v1211, %v980
      %v1246 = vsel %vm1222, %v1213, %v982
      %v1248 = vsel %vm1222, %v1215, %v984
      %v1250 = vsel %vm1222, %v1217, %v986
      %v1252 = vsel %vm1222, %v1219, %v988
      %v1254 = vsel %vm1222, %v1221, %v990
      %v1255 = vld [vmem:[%s248] sm:$0xf]
      %v1256 = vld [vmem:[%s248 + $0x4] sm:$0xf]
      %v1257 = vld [vmem:[%s248 + $0x8] sm:$0xf]
      %v1258 = vld [vmem:[%s248 + $0xc] sm:$0xf]
      %v1259 = vld [vmem:[%s248 + $0x10] sm:$0x3]
      %v1265 = vunpack.c.l.b16 %v1255
      %v1266 = vunpack.c.l.b16 %v1256
      %v1267 = vunpack.c.l.b16 %v1257
      %v1268 = vunpack.c.l.b16 %v1258
      %v1269 = vunpack.c.l.b16 %v1259
      %v1270 = vpack.c.b16 %v1266, %v1265
      %v1271 = vpack.c.b16 %v1268, %v1267
      %v1272 = vpack.c.b16 %v1269, %v1269
      %vm1275 = vcmask 293888
      %v1276 = vsel %vm1275, %v1224, 0
      %v1278 = vsel %vm1275, %v1226, 0
      %v1280 = vsel %vm1275, %v1228, 0
      %v1282 = vsel %vm1275, %v1230, 0
      %v1284 = vsel %vm1275, %v1232, 0
      %v1286 = vsel %vm1275, %v1234, 0
      %v1288 = vsel %vm1275, %v1236, 0
      %v1290 = vsel %vm1275, %v1238, 0
      %v1292 = vsel %vm1275, %v1240, 0
      %v1294 = vsel %vm1275, %v1242, 0
      %v1296 = vsel %vm1275, %v1244, 0
      %v1298 = vsel %vm1275, %v1246, 0
      %v1300 = vsel %vm1275, %v1248, 0
      %v1302 = vsel %vm1275, %v1250, 0
      %v1304 = vsel %vm1275, %v1252, 0
      %v1306 = vsel %vm1275, %v1254, 0
      %vm1308 = vcmask 1041408
      %v1310 = vsel %vm1308, %v1272, 0
      %1312 = vmatprep.subr.bf16.mxu0 0
      %1313 = vmatpush1.bf16.msra.mxu0 %v1270
      %1314 = vmatprep.subr.bf16.mxu0 0
      %1315 = vmatpush1.bf16.msra.mxu0 %v1271
      %1316 = vmatprep.subr.bf16.mxu0 0
      %1317 = vmatpush1.bf16.msra.mxu0 %v1310
      %1318 = vmatprep.subr.bf16.mxu0 0
      %1319 = vmatpush1.bf16.msra.mxu0 0
      %1320 = vmatprep.subr.bf16.mxu0 0
      %1321 = vmatpush1.bf16.msra.mxu0 0
      %1322 = vmatprep.subr.bf16.mxu0 0
      %1323 = vmatpush1.bf16.msra.mxu0 0
      %1324 = vmatprep.subr.bf16.mxu0 0
      %1325 = vmatpush1.bf16.msra.mxu0 0
      %1326 = vmatprep.subr.bf16.mxu0 0
      %1327 = vmatpush1.bf16.msra.mxu0 0
      %1328 = vmatprep.subr.bf16.mxu0 0
      %1329 = vmatpush1.bf16.msra.mxu0 0
      %1330 = vmatprep.subr.bf16.mxu0 0
      %1331 = vmatpush1.bf16.msra.mxu0 0
      %1332 = vmatprep.subr.bf16.mxu0 0
      %1333 = vmatpush1.bf16.msra.mxu0 0
      %1334 = vmatprep.subr.bf16.mxu0 0
      %1335 = vmatpush1.bf16.msra.mxu0 0
      %1336 = vmatprep.subr.bf16.mxu0 0
      %1337 = vmatpush1.bf16.msra.mxu0 0
      %1338 = vmatprep.subr.bf16.mxu0 0
      %1339 = vmatpush1.bf16.msra.mxu0 0
      %1340 = vmatprep.subr.bf16.mxu0 0
      %1341 = vmatpush1.bf16.msra.mxu0 0
      %1342 = vmatprep.subr.bf16.mxu0 0
      %1343 = vmatpush1.bf16.msra.mxu0 0
      %1344 = vmatprep.mubr.bf16.mxu0 0
      %1345 = vmatmul.mubr.bf16.gmra.mrb[0].mxu0 %v1276
      %v1346 = vpop.f32.mrb[0].mxu0
      %v1347 = vadd.f32 0.0, %v1346
      %v1348 = vpop.f32.mrb[0].mxu0
      %v1349 = vpop.f32.mrb[0].mxu0
      %v1350 = vadd.f32 0.0, %v1349
      %v1351 = vpop.f32.mrb[0].mxu0
      %1352 = vmatprep.mubr.bf16.mxu0 0
      %1353 = vmatmul.mubr.bf16.gmra.mrb[0].mxu0 %v1278
      %v1354 = vpop.f32.mrb[0].mxu0
      %v1355 = vadd.f32 0.0, %v1354
      %v1356 = vpop.f32.mrb[0].mxu0
      %v1357 = vpop.f32.mrb[0].mxu0
      %v1358 = vadd.f32 0.0, %v1357
      %v1359 = vpop.f32.mrb[0].mxu0
      %1360 = vmatprep.mubr.bf16.mxu0 0
      %1361 = vmatmul.mubr.bf16.gmra.mrb[0].mxu0 %v1280
      %v1362 = vpop.f32.mrb[0].mxu0
      %v1363 = vadd.f32 0.0, %v1362
      %v1364 = vpop.f32.mrb[0].mxu0
      %v1365 = vpop.f32.mrb[0].mxu0
      %v1366 = vadd.f32 0.0, %v1365
      %v1367 = vpop.f32.mrb[0].mxu0
      %1368 = vmatprep.mubr.bf16.mxu0 0
      %1369 = vmatmul.mubr.bf16.gmra.mrb[0].mxu0 %v1282
      %v1370 = vpop.f32.mrb[0].mxu0
      %v1371 = vadd.f32 0.0, %v1370
      %v1372 = vpop.f32.mrb[0].mxu0
      %v1373 = vpop.f32.mrb[0].mxu0
      %v1374 = vadd.f32 0.0, %v1373
      %v1375 = vpop.f32.mrb[0].mxu0
      %1376 = vmatprep.mubr.bf16.mxu0 0
      %1377 = vmatmul.mubr.bf16.gmra.mrb[0].mxu0 %v1284
      %v1378 = vpop.f32.mrb[0].mxu0
      %v1379 = vadd.f32 0.0, %v1378
      %v1380 = vpop.f32.mrb[0].mxu0
      %v1381 = vpop.f32.mrb[0].mxu0
      %v1382 = vadd.f32 0.0, %v1381
      %v1383 = vpop.f32.mrb[0].mxu0
      %1384 = vmatprep.mubr.bf16.mxu0 0
      %1385 = vmatmul.mubr.bf16.gmra.mrb[0].mxu0 %v1286
      %v1386 = vpop.f32.mrb[0].mxu0
      %v1387 = vadd.f32 0.0, %v1386
      %v1388 = vpop.f32.mrb[0].mxu0
      %v1389 = vpop.f32.mrb[0].mxu0
      %v1390 = vadd.f32 0.0, %v1389
      %v1391 = vpop.f32.mrb[0].mxu0
      %1392 = vmatprep.mubr.bf16.mxu0 0
      %1393 = vmatmul.mubr.bf16.gmra.mrb[0].mxu0 %v1288
      %v1394 = vpop.f32.mrb[0].mxu0
      %v1395 = vadd.f32 0.0, %v1394
      %v1396 = vpop.f32.mrb[0].mxu0
      %v1397 = vpop.f32.mrb[0].mxu0
      %v1398 = vadd.f32 0.0, %v1397
      %v1399 = vpop.f32.mrb[0].mxu0
      %1400 = vmatprep.mubr.bf16.mxu0 0
      %1401 = vmatmul.mubr.bf16.gmra.mrb[0].mxu0 %v1290
      %v1402 = vpop.f32.mrb[0].mxu0
      %v1403 = vadd.f32 0.0, %v1402
      %v1404 = vpop.f32.mrb[0].mxu0
      %v1405 = vpop.f32.mrb[0].mxu0
      %v1406 = vadd.f32 0.0, %v1405
      %v1407 = vpop.f32.mrb[0].mxu0
      %1408 = vmatprep.mubr.bf16.mxu0 0
      %1409 = vmatmul.mubr.bf16.gmra.mrb[0].mxu0 %v1292
      %v1410 = vpop.f32.mrb[0].mxu0
      %v1411 = vadd.f32 0.0, %v1410
      %v1412 = vpop.f32.mrb[0].mxu0
      %v1413 = vpop.f32.mrb[0].mxu0
      %v1414 = vadd.f32 0.0, %v1413
      %v1415 = vpop.f32.mrb[0].mxu0
      %1416 = vmatprep.mubr.bf16.mxu0 0
      %1417 = vmatmul.mubr.bf16.gmra.mrb[0].mxu0 %v1294
      %v1418 = vpop.f32.mrb[0].mxu0
      %v1419 = vadd.f32 0.0, %v1418
      %v1420 = vpop.f32.mrb[0].mxu0
      %v1421 = vpop.f32.mrb[0].mxu0
      %v1422 = vadd.f32 0.0, %v1421
      %v1423 = vpop.f32.mrb[0].mxu0
      %1424 = vmatprep.mubr.bf16.mxu0 0
      %1425 = vmatmul.mubr.bf16.gmra.mrb[0].mxu0 %v1296
      %v1426 = vpop.f32.mrb[0].mxu0
      %v1427 = vadd.f32 0.0, %v1426
      %v1428 = vpop.f32.mrb[0].mxu0
      %v1429 = vpop.f32.mrb[0].mxu0
      %v1430 = vadd.f32 0.0, %v1429
      %v1431 = vpop.f32.mrb[0].mxu0
      %1432 = vmatprep.mubr.bf16.mxu0 0
      %1433 = vmatmul.mubr.bf16.gmra.mrb[0].mxu0 %v1298
      %v1434 = vpop.f32.mrb[0].mxu0
      %v1435 = vadd.f32 0.0, %v1434
      %v1436 = vpop.f32.mrb[0].mxu0
      %v1437 = vpop.f32.mrb[0].mxu0
      %v1438 = vadd.f32 0.0, %v1437
      %v1439 = vpop.f32.mrb[0].mxu0
      %1440 = vmatprep.mubr.bf16.mxu0 0
      %1441 = vmatmul.mubr.bf16.gmra.mrb[0].mxu0 %v1300
      %v1442 = vpop.f32.mrb[0].mxu0
      %v1443 = vadd.f32 0.0, %v1442
      %v1444 = vpop.f32.mrb[0].mxu0
      %v1445 = vpop.f32.mrb[0].mxu0
      %v1446 = vadd.f32 0.0, %v1445
      %v1447 = vpop.f32.mrb[0].mxu0
      %1448 = vmatprep.mubr.bf16.mxu0 0
      %1449 = vmatmul.mubr.bf16.gmra.mrb[0].mxu0 %v1302
      %v1450 = vpop.f32.mrb[0].mxu0
      %v1451 = vadd.f32 0.0, %v1450
      %v1452 = vpop.f32.mrb[0].mxu0
      %v1453 = vpop.f32.mrb[0].mxu0
      %v1454 = vadd.f32 0.0, %v1453
      %v1455 = vpop.f32.mrb[0].mxu0
      %1456 = vmatprep.mubr.bf16.mxu0 0
      %1457 = vmatmul.mubr.bf16.gmra.mrb[0].mxu0 %v1304
      %v1458 = vpop.f32.mrb[0].mxu0
      %v1459 = vadd.f32 0.0, %v1458
      %v1460 = vpop.f32.mrb[0].mxu0
      %v1461 = vpop.f32.mrb[0].mxu0
      %v1462 = vadd.f32 0.0, %v1461
      %v1463 = vpop.f32.mrb[0].mxu0
      %1464 = vmatprep.mubr.bf16.mxu0 0
      %1465 = vmatmul.mubr.bf16.gmra.mrb[0].mxu0 %v1306
      %v1466 = vpop.f32.mrb[0].mxu0
      %v1467 = vadd.f32 0.0, %v1466
      %v1468 = vpop.f32.mrb[0].mxu0
      %v1469 = vpop.f32.mrb[0].mxu0
      %v1470 = vadd.f32 0.0, %v1469
      %v1471 = vpop.f32.mrb[0].mxu0
      %1472 = vdwg.mxu0
      %v1473 = vld [vmem:[%s251] sm:$0x1]
      %v1475 = vlaneseq
      %v1476 = vshrl.u32 %v1475, 7
      %v1477 = vsub.s32 0, %v1476
      %v1478 = vrot.slane %v1473, %v1477
      %v1480 = vmul.f32 %v1347, %v1478
      %v1481 = vmul.f32 %v1350, %v1478
      %v1482 = vmul.f32 %v1355, %v1478
      %v1483 = vmul.f32 %v1358, %v1478
      %v1484 = vmul.f32 %v1363, %v1478
      %v1485 = vmul.f32 %v1366, %v1478
      %v1486 = vmul.f32 %v1371, %v1478
      %v1487 = vmul.f32 %v1374, %v1478
      %v1488 = vmul.f32 %v1379, %v1478
      %v1489 = vmul.f32 %v1382, %v1478
      %v1490 = vmul.f32 %v1387, %v1478
      %v1491 = vmul.f32 %v1390, %v1478
      %v1492 = vmul.f32 %v1395, %v1478
      %v1493 = vmul.f32 %v1398, %v1478
      %v1494 = vmul.f32 %v1403, %v1478
      %v1495 = vmul.f32 %v1406, %v1478
      %v1496 = vmul.f32 %v1411, %v1478
      %v1497 = vmul.f32 %v1414, %v1478
      %v1498 = vmul.f32 %v1419, %v1478
      %v1499 = vmul.f32 %v1422, %v1478
      %v1500 = vmul.f32 %v1427, %v1478
      %v1501 = vmul.f32 %v1430, %v1478
      %v1502 = vmul.f32 %v1435, %v1478
      %v1503 = vmul.f32 %v1438, %v1478
      %v1504 = vmul.f32 %v1443, %v1478
      %v1505 = vmul.f32 %v1446, %v1478
      %v1506 = vmul.f32 %v1451, %v1478
      %v1507 = vmul.f32 %v1454, %v1478
      %v1508 = vmul.f32 %v1459, %v1478
      %v1509 = vmul.f32 %v1462, %v1478
      %v1510 = vmul.f32 %v1467, %v1478
      %v1511 = vmul.f32 %v1470, %v1478
      %v1512 = vld [vmem:[%s254] sm:$0x1]
      %v1514 = vlaneseq
      %v1515 = vshrl.u32 %v1514, 7
      %v1516 = vsub.s32 0, %v1515
      %v1517 = vrot.slane %v1512, %v1516
      %v1519 = vadd.f32 %v1480, %v1517
      %v1520 = vadd.f32 %v1481, %v1517
      %v1521 = vadd.f32 %v1482, %v1517
      %v1522 = vadd.f32 %v1483, %v1517
      %v1523 = vadd.f32 %v1484, %v1517
      %v1524 = vadd.f32 %v1485, %v1517
      %v1525 = vadd.f32 %v1486, %v1517
      %v1526 = vadd.f32 %v1487, %v1517
      %v1527 = vadd.f32 %v1488, %v1517
      %v1528 = vadd.f32 %v1489, %v1517
      %v1529 = vadd.f32 %v1490, %v1517
      %v1530 = vadd.f32 %v1491, %v1517
      %v1531 = vadd.f32 %v1492, %v1517
      %v1532 = vadd.f32 %v1493, %v1517
      %v1533 = vadd.f32 %v1494, %v1517
      %v1534 = vadd.f32 %v1495, %v1517
      %v1535 = vadd.f32 %v1496, %v1517
      %v1536 = vadd.f32 %v1497, %v1517
      %v1537 = vadd.f32 %v1498, %v1517
      %v1538 = vadd.f32 %v1499, %v1517
      %v1539 = vadd.f32 %v1500, %v1517
      %v1540 = vadd.f32 %v1501, %v1517
      %v1541 = vadd.f32 %v1502, %v1517
      %v1542 = vadd.f32 %v1503, %v1517
      %v1543 = vadd.f32 %v1504, %v1517
      %v1544 = vadd.f32 %v1505, %v1517
      %v1545 = vadd.f32 %v1506, %v1517
      %v1546 = vadd.f32 %v1507, %v1517
      %v1547 = vadd.f32 %v1508, %v1517
      %v1548 = vadd.f32 %v1509, %v1517
      %v1549 = vadd.f32 %v1510, %v1517
      %v1550 = vadd.f32 %v1511, %v1517
      %v1551 = vxor.u32 %v1519, 2147483648
      %v1552 = vxor.u32 %v1520, 2147483648
      %v1553 = vxor.u32 %v1521, 2147483648
      %v1554 = vxor.u32 %v1522, 2147483648
      %v1555 = vxor.u32 %v1523, 2147483648
      %v1556 = vxor.u32 %v1524, 2147483648
      %v1557 = vxor.u32 %v1525, 2147483648
      %v1558 = vxor.u32 %v1526, 2147483648
      %v1559 = vxor.u32 %v1527, 2147483648
      %v1560 = vxor.u32 %v1528, 2147483648
      %v1561 = vxor.u32 %v1529, 2147483648
      %v1562 = vxor.u32 %v1530, 2147483648
      %v1563 = vxor.u32 %v1531, 2147483648
      %v1564 = vxor.u32 %v1532, 2147483648
      %v1565 = vxor.u32 %v1533, 2147483648
      %v1566 = vxor.u32 %v1534, 2147483648
      %v1567 = vxor.u32 %v1535, 2147483648
      %v1568 = vxor.u32 %v1536, 2147483648
      %v1569 = vxor.u32 %v1537, 2147483648
      %v1570 = vxor.u32 %v1538, 2147483648
      %v1571 = vxor.u32 %v1539, 2147483648
      %v1572 = vxor.u32 %v1540, 2147483648
      %v1573 = vxor.u32 %v1541, 2147483648
      %v1574 = vxor.u32 %v1542, 2147483648
      %v1575 = vxor.u32 %v1543, 2147483648
      %v1576 = vxor.u32 %v1544, 2147483648
      %v1577 = vxor.u32 %v1545, 2147483648
      %v1578 = vxor.u32 %v1546, 2147483648
      %v1579 = vxor.u32 %v1547, 2147483648
      %v1580 = vxor.u32 %v1548, 2147483648
      %v1581 = vxor.u32 %v1549, 2147483648
      %v1582 = vxor.u32 %v1550, 2147483648
      %v1583 = vmul.f32 %v1551, 1.442695
      %v1584 = vpow.pop %v1583
      %v1585 = vmul.f32 %v1552, 1.442695
      %v1586 = vpow.pop %v1585
      %v1587 = vmul.f32 %v1553, 1.442695
      %v1588 = vpow.pop %v1587
      %v1589 = vmul.f32 %v1554, 1.442695
      %v1590 = vpow.pop %v1589
      %v1591 = vmul.f32 %v1555, 1.442695
      %v1592 = vpow.pop %v1591
      %v1593 = vmul.f32 %v1556, 1.442695
      %v1594 = vpow.pop %v1593
      %v1595 = vmul.f32 %v1557, 1.442695
      %v1596 = vpow.pop %v1595
      %v1597 = vmul.f32 %v1558, 1.442695
      %v1598 = vpow.pop %v1597
      %v1599 = vmul.f32 %v1559, 1.442695
      %v1600 = vpow.pop %v1599
      %v1601 = vmul.f32 %v1560, 1.442695
      %v1602 = vpow.pop %v1601
      %v1603 = vmul.f32 %v1561, 1.442695
      %v1604 = vpow.pop %v1603
      %v1605 = vmul.f32 %v1562, 1.442695
      %v1606 = vpow.pop %v1605
      %v1607 = vmul.f32 %v1563, 1.442695
      %v1608 = vpow.pop %v1607
      %v1609 = vmul.f32 %v1564, 1.442695
      %v1610 = vpow.pop %v1609
      %v1611 = vmul.f32 %v1565, 1.442695
      %v1612 = vpow.pop %v1611
      %v1613 = vmul.f32 %v1566, 1.442695
      %v1614 = vpow.pop %v1613
      %v1615 = vmul.f32 %v1567, 1.442695
      %v1616 = vpow.pop %v1615
      %v1617 = vmul.f32 %v1568, 1.442695
      %v1618 = vpow.pop %v1617
      %v1619 = vmul.f32 %v1569, 1.442695
      %v1620 = vpow.pop %v1619
      %v1621 = vmul.f32 %v1570, 1.442695
      %v1622 = vpow.pop %v1621
      %v1623 = vmul.f32 %v1571, 1.442695
      %v1624 = vpow.pop %v1623
      %v1625 = vmul.f32 %v1572, 1.442695
      %v1626 = vpow.pop %v1625
      %v1627 = vmul.f32 %v1573, 1.442695
      %v1628 = vpow.pop %v1627
      %v1629 = vmul.f32 %v1574, 1.442695
      %v1630 = vpow.pop %v1629
      %v1631 = vmul.f32 %v1575, 1.442695
      %v1632 = vpow.pop %v1631
      %v1633 = vmul.f32 %v1576, 1.442695
      %v1634 = vpow.pop %v1633
      %v1635 = vmul.f32 %v1577, 1.442695
      %v1636 = vpow.pop %v1635
      %v1637 = vmul.f32 %v1578, 1.442695
      %v1638 = vpow.pop %v1637
      %v1639 = vmul.f32 %v1579, 1.442695
      %v1640 = vpow.pop %v1639
      %v1641 = vmul.f32 %v1580, 1.442695
      %v1642 = vpow.pop %v1641
      %v1643 = vmul.f32 %v1581, 1.442695
      %v1644 = vpow.pop %v1643
      %v1645 = vmul.f32 %v1582, 1.442695
      %v1646 = vpow.pop %v1645
      %v1647 = vadd.f32 %v1584, 1.0
      %v1648 = vadd.f32 %v1586, 1.0
      %v1649 = vadd.f32 %v1588, 1.0
      %v1650 = vadd.f32 %v1590, 1.0
      %v1651 = vadd.f32 %v1592, 1.0
      %v1652 = vadd.f32 %v1594, 1.0
      %v1653 = vadd.f32 %v1596, 1.0
      %v1654 = vadd.f32 %v1598, 1.0
      %v1655 = vadd.f32 %v1600, 1.0
      %v1656 = vadd.f32 %v1602, 1.0
      %v1657 = vadd.f32 %v1604, 1.0
      %v1658 = vadd.f32 %v1606, 1.0
      %v1659 = vadd.f32 %v1608, 1.0
      %v1660 = vadd.f32 %v1610, 1.0
      %v1661 = vadd.f32 %v1612, 1.0
      %v1662 = vadd.f32 %v1614, 1.0
      %v1663 = vadd.f32 %v1616, 1.0
      %v1664 = vadd.f32 %v1618, 1.0
      %v1665 = vadd.f32 %v1620, 1.0
      %v1666 = vadd.f32 %v1622, 1.0
      %v1667 = vadd.f32 %v1624, 1.0
      %v1668 = vadd.f32 %v1626, 1.0
      %v1669 = vadd.f32 %v1628, 1.0
      %v1670 = vadd.f32 %v1630, 1.0
      %v1671 = vadd.f32 %v1632, 1.0
      %v1672 = vadd.f32 %v1634, 1.0
      %v1673 = vadd.f32 %v1636, 1.0
      %v1674 = vadd.f32 %v1638, 1.0
      %v1675 = vadd.f32 %v1640, 1.0
      %v1676 = vadd.f32 %v1642, 1.0
      %v1677 = vadd.f32 %v1644, 1.0
      %v1678 = vadd.f32 %v1646, 1.0
      %v1679 = vrcp.pop %v1647
      %v1680 = vmul.f32 1.0, %v1679
      %v1681 = vrcp.pop %v1648
      %v1682 = vmul.f32 1.0, %v1681
      %v1683 = vrcp.pop %v1649
      %v1684 = vmul.f32 1.0, %v1683
      %v1685 = vrcp.pop %v1650
      %v1686 = vmul.f32 1.0, %v1685
      %v1687 = vrcp.pop %v1651
      %v1688 = vmul.f32 1.0, %v1687
      %v1689 = vrcp.pop %v1652
      %v1690 = vmul.f32 1.0, %v1689
      %v1691 = vrcp.pop %v1653
      %v1692 = vmul.f32 1.0, %v1691
      %v1693 = vrcp.pop %v1654
      %v1694 = vmul.f32 1.0, %v1693
      %v1695 = vrcp.pop %v1655
      %v1696 = vmul.f32 1.0, %v1695
      %v1697 = vrcp.pop %v1656
      %v1698 = vmul.f32 1.0, %v1697
      %v1699 = vrcp.pop %v1657
      %v1700 = vmul.f32 1.0, %v1699
      %v1701 = vrcp.pop %v1658
      %v1702 = vmul.f32 1.0, %v1701
      %v1703 = vrcp.pop %v1659
      %v1704 = vmul.f32 1.0, %v1703
      %v1705 = vrcp.pop %v1660
      %v1706 = vmul.f32 1.0, %v1705
      %v1707 = vrcp.pop %v1661
      %v1708 = vmul.f32 1.0, %v1707
      %v1709 = vrcp.pop %v1662
      %v1710 = vmul.f32 1.0, %v1709
      %v1711 = vrcp.pop %v1663
      %v1712 = vmul.f32 1.0, %v1711
      %v1713 = vrcp.pop %v1664
      %v1714 = vmul.f32 1.0, %v1713
      %v1715 = vrcp.pop %v1665
      %v1716 = vmul.f32 1.0, %v1715
      %v1717 = vrcp.pop %v1666
      %v1718 = vmul.f32 1.0, %v1717
      %v1719 = vrcp.pop %v1667
      %v1720 = vmul.f32 1.0, %v1719
      %v1721 = vrcp.pop %v1668
      %v1722 = vmul.f32 1.0, %v1721
      %v1723 = vrcp.pop %v1669
      %v1724 = vmul.f32 1.0, %v1723
      %v1725 = vrcp.pop %v1670
      %v1726 = vmul.f32 1.0, %v1725
      %v1727 = vrcp.pop %v1671
      %v1728 = vmul.f32 1.0, %v1727
      %v1729 = vrcp.pop %v1672
      %v1730 = vmul.f32 1.0, %v1729
      %v1731 = vrcp.pop %v1673
      %v1732 = vmul.f32 1.0, %v1731
      %v1733 = vrcp.pop %v1674
      %v1734 = vmul.f32 1.0, %v1733
      %v1735 = vrcp.pop %v1675
      %v1736 = vmul.f32 1.0, %v1735
      %v1737 = vrcp.pop %v1676
      %v1738 = vmul.f32 1.0, %v1737
      %v1739 = vrcp.pop %v1677
      %v1740 = vmul.f32 1.0, %v1739
      %v1741 = vrcp.pop %v1678
      %v1742 = vmul.f32 1.0, %v1741
      %v1743 = vmul.f32 %v1519, %v1680
      %v1744 = vmul.f32 %v1520, %v1682
      %v1745 = vmul.f32 %v1521, %v1684
      %v1746 = vmul.f32 %v1522, %v1686
      %v1747 = vmul.f32 %v1523, %v1688
      %v1748 = vmul.f32 %v1524, %v1690
      %v1749 = vmul.f32 %v1525, %v1692
      %v1750 = vmul.f32 %v1526, %v1694
      %v1751 = vmul.f32 %v1527, %v1696
      %v1752 = vmul.f32 %v1528, %v1698
      %v1753 = vmul.f32 %v1529, %v1700
      %v1754 = vmul.f32 %v1530, %v1702
      %v1755 = vmul.f32 %v1531, %v1704
      %v1756 = vmul.f32 %v1532, %v1706
      %v1757 = vmul.f32 %v1533, %v1708
      %v1758 = vmul.f32 %v1534, %v1710
      %v1759 = vmul.f32 %v1535, %v1712
      %v1760 = vmul.f32 %v1536, %v1714
      %v1761 = vmul.f32 %v1537, %v1716
      %v1762 = vmul.f32 %v1538, %v1718
      %v1763 = vmul.f32 %v1539, %v1720
      %v1764 = vmul.f32 %v1540, %v1722
      %v1765 = vmul.f32 %v1541, %v1724
      %v1766 = vmul.f32 %v1542, %v1726
      %v1767 = vmul.f32 %v1543, %v1728
      %v1768 = vmul.f32 %v1544, %v1730
      %v1769 = vmul.f32 %v1545, %v1732
      %v1770 = vmul.f32 %v1546, %v1734
      %v1771 = vmul.f32 %v1547, %v1736
      %v1772 = vmul.f32 %v1548, %v1738
      %v1773 = vmul.f32 %v1549, %v1740
      %v1774 = vmul.f32 %v1550, %v1742
      %1775 = vst [vmem:[%s262] sm:$0xff] %v1743
      %1776 = vst [vmem:[%s262 + $0x8] sm:$0xff] %v1744
      %1777 = vst [vmem:[%s262 + $0x10] sm:$0xff] %v1745
      %1778 = vst [vmem:[%s262 + $0x18] sm:$0xff] %v1746
      %1779 = vst [vmem:[%s262 + $0x20] sm:$0xff] %v1747
      %1780 = vst [vmem:[%s262 + $0x28] sm:$0xff] %v1748
      %1781 = vst [vmem:[%s262 + $0x30] sm:$0xff] %v1749
      %1782 = vst [vmem:[%s262 + $0x38] sm:$0xff] %v1750
      %1783 = vst [vmem:[%s262 + $0x40] sm:$0xff] %v1751
      %1784 = vst [vmem:[%s262 + $0x48] sm:$0xff] %v1752
      %1785 = vst [vmem:[%s262 + $0x50] sm:$0xff] %v1753
      %1786 = vst [vmem:[%s262 + $0x58] sm:$0xff] %v1754
      %1787 = vst [vmem:[%s262 + $0x60] sm:$0xff] %v1755
      %1788 = vst [vmem:[%s262 + $0x68] sm:$0xff] %v1756
      %1789 = vst [vmem:[%s262 + $0x70] sm:$0xff] %v1757
      %1790 = vst [vmem:[%s262 + $0x78] sm:$0xff] %v1758
      %1791 = vst [vmem:[%s262 + $0x80] sm:$0xff] %v1759
      %1792 = vst [vmem:[%s262 + $0x88] sm:$0xff] %v1760
      %1793 = vst [vmem:[%s262 + $0x90] sm:$0xff] %v1761
      %1794 = vst [vmem:[%s262 + $0x98] sm:$0xff] %v1762
      %1795 = vst [vmem:[%s262 + $0xa0] sm:$0xff] %v1763
      %1796 = vst [vmem:[%s262 + $0xa8] sm:$0xff] %v1764
      %1797 = vst [vmem:[%s262 + $0xb0] sm:$0xff] %v1765
      %1798 = vst [vmem:[%s262 + $0xb8] sm:$0xff] %v1766
      %1799 = vst [vmem:[%s262 + $0xc0] sm:$0xff] %v1767
      %1800 = vst [vmem:[%s262 + $0xc8] sm:$0xff] %v1768
      %1801 = vst [vmem:[%s262 + $0xd0] sm:$0xff] %v1769
      %1802 = vst [vmem:[%s262 + $0xd8] sm:$0xff] %v1770
      %1803 = vst [vmem:[%s262 + $0xe0] sm:$0xff] %v1771
      %1804 = vst [vmem:[%s262 + $0xe8] sm:$0xff] %v1772
      %1805 = vst [vmem:[%s262 + $0xf0] sm:$0xff] %v1773
      %1806 = vst [vmem:[%s262 + $0xf8] sm:$0xff] %v1774
      %s1807 = smul.u32 32, %s20
      %p1808 = scmp.lt.s32.totalorder %s1807, 63
      %s1809 = scalar_select %p1808, %s1807, 63
      %p1810 = scmp.lt.s32.totalorder %s19, 0
      %s1811 = scalar_select %p1810, %s19, 0
      %s1812 = sadd.s32 %s1811, %s1809
      %s1813 = smul.addr %s1812, 8
      %s1814 = scalar_lea.vmem %s4, %s1813
      // Predicated region
      $region37: #{conv_bn_silu.1} parent=35 // pred_check
        %p1815 = pneg %p151
      $region38: #{conv_bn_silu.1} parent=35 // pred_check_branch
        %1817 = sbr.rel (%p1815) target = $region40
      $region39: #{conv_bn_silu.1} parent=35 // pred_region
        %s1818 = smul.u32 32, %s20
      $region40: #{conv_bn_silu.1} parent=35 // pred_fallthru
        _
    $region36: #{conv_bn_silu.1} parent=5 // pred_fallthru
      _
    %p1819 = scmp.le.s32.totalorder 2, %s10
    // Predicated region
    $region41: #{conv_bn_silu.1} parent=5 // pred_check
      %p1820 = pneg %p1819
    $region42: #{conv_bn_silu.1} parent=5 // pred_check_branch
      %1822 = sbr.rel (%p1820) target = $region44
    $region43: #{conv_bn_silu.1} parent=5 // pred_region
      %s1823 = ssub.s32 %s10, 2
      // Predicated region
      $region45: #{conv_bn_silu.1} parent=43 // pred_check
        %p1824 = pneg %p157
      $region46: #{conv_bn_silu.1} parent=43 // pred_check_branch
        %1826 = sbr.rel (%p1824) target = $region48
      $region47: #{conv_bn_silu.1} parent=43 // pred_region
        %s1827 = smul.u32 32, %s22
        %p1828 = scmp.lt.s32.totalorder %s1827, 63
        %s1829 = scalar_select %p1828, %s1827, 63
        %p1830 = scmp.lt.s32.totalorder %s21, 0
        %s1831 = scalar_select %p1830, %s21, 0
        %s1832 = sadd.s32 %s1831, %s1829
        %s1833 = smul.addr %s1832, 8
        %s1834 = scalar_lea.vmem %s4, %s1833
      $region48: #{conv_bn_silu.1} parent=43 // pred_fallthru
        _
    $region44: #{conv_bn_silu.1} parent=5 // pred_fallthru
      _
  $region6: #{conv_bn_silu.1} parent=0 // loop_footer
    %s14 = sadd.s32 1, %s10
  $region7: #{conv_bn_silu.1} parent=0 // loop_footer_branch
    %9 = sbr.rel target = $region3
  $region8: #{conv_bn_silu.1} parent=0 // loop_exit
    _

</llo_original>
